<compile_context>
chip_gen: v6e
topology: v6e:2x2x1
jax: 0.10.0
libtpu: 0.0.40
codegen_flags: <defaults>
</compile_context>

<pallas_src>
import functools

import numpy as np
import jax
import jax.numpy as jnp
from jax.experimental import pallas as pl
from jax.experimental.pallas import tpu as pltpu

NEG_SLOPE = 0.01   # nn.LeakyReLU default
BN_EPS = 1e-5      # nn.BatchNorm1d default


# ----------------------------- fused Pallas kernel --------------------------

def _fused_cnn_kernel(x_ref, mask_ref, w_ref, wres_ref, rb_ref, o_ref, buf, *,
                      num_layers, C, K, NLP, C_in, C_out, use_res_conv):
    # x_ref:    (C_in, NLP)                lane-dense input slab (one 128-block per batch elem)
    # mask_ref: (1, NLP)                   1.0 at data lanes, 0.0 at padding lanes
    # w_ref:    (num_layers, K, 3C, 3C+1)  per-tap weights, BN scale folded in rows,
    #                                      folded bias in column 3C of the center tap
    # wres_ref: (C_out, C_in)              1x1 residual conv, BN scale folded in rows
    # rb_ref:   (C_out, 1)                 residual folded bias
    # o_ref:    (3*C_out, NLP)             lane-dense output slab
    # buf:      VMEM (3C+1, NLP)           activation slab; last row = data-lane ones (bias row)
    B = 3
    pad = (K - 1) // 2
    R = B * C
    lane_mask = mask_ref[...]                                     # (1, NLP)

    # ---- residual path (shared by all branches): 1x1 conv + folded BN, or identity.
    x0 = x_ref[...]                                               # (C_in, NLP)
    if use_res_conv:
        res = jnp.dot(wres_ref[...], x0, preferred_element_type=jnp.float32) + rb_ref[...]
    else:
        res = x0                                                  # C_in == C_out here

    # ---- stage input + bias row; single aligned full-slab stores, no per-n loops.
    buf[...] = jnp.zeros_like(buf)
    buf[0:C_in, :] = x0
    buf[R:R + 1, :] = lane_mask

    # ---- conv + BN stack: K shifted-accumulate matmuls per layer (no im2col).
    for j in range(num_layers):
        act = buf[...]                                            # (R+1, NLP)
        acc = None
        for k in range(K):
            shift = (pad - k) % NLP
            a_k = act if shift == 0 else pltpu.roll(act, shift=shift, axis=1)
            t = jnp.dot(w_ref[j, k], a_k, preferred_element_type=jnp.float32)
            acc = t if acc is None else acc + t                   # (R, NLP)

        if j + 1 < num_layers:
            # re-zero padding lanes so the next layer's rolls see proper conv zero padding
            buf[0:R, :] = acc * lane_mask
        else:
            # epilogue: residual add + LeakyReLU + channel concat, lane-dense stores
            for b in range(B):
                y = acc[b * C:b * C + C_out, :] + res
                y = jnp.where(y >= 0.0, y, NEG_SLOPE * y)
                o_ref[b * C_out:(b + 1) * C_out, :] = y.astype(o_ref.dtype)


# ------------------------------ forward wrapper ------------------------------

def cnn_forward(packed, inputs_hybrid, inputs_esm2):
    """Full CNN forward as one fused Pallas call. Returns (muti_result, esm_result)."""
    N, C_in, L = inputs_hybrid.shape
    C, K, C_out = packed["C"], packed["K"], packed["C_out"]
    num_layers, use_res_conv = packed["num_layers"], packed["use_res_conv"]
    B = 3
    R = B * C
    pad = (K - 1) // 2
    LP = ((L + pad + 127) // 128) * 128          # lane-aligned block per batch element
    NLP = N * LP

    # lane-dense input slab: each batch element in its own 128-aligned lane block,
    # trailing lanes zero (they double as conv zero-padding inside the kernel).
    x_t = jnp.transpose(inputs_hybrid, (1, 0, 2)).astype(jnp.float32)      # (C_in, N, L)
    x_slab = jnp.pad(x_t, ((0, 0), (0, 0), (0, LP - L))).reshape(C_in, NLP)
    lane_mask = jnp.asarray(
        (np.arange(NLP) % LP < L).astype(np.float32))[None, :]             # (1, NLP)

    kernel = functools.partial(
        _fused_cnn_kernel, num_layers=num_layers, C=C, K=K, NLP=NLP,
        C_in=C_in, C_out=C_out, use_res_conv=use_res_conv)

    out_slab = pl.pallas_call(
        kernel,
        out_shape=jax.ShapeDtypeStruct((B * C_out, NLP), jnp.float32),
        grid=(1,),
        in_specs=[
            pl.BlockSpec((C_in, NLP), lambda i: (0, 0)),
            pl.BlockSpec((1, NLP), lambda i: (0, 0)),
            pl.BlockSpec((num_layers, K, R, R + 1), lambda i: (0, 0, 0, 0)),
            pl.BlockSpec((C_out, C_in), lambda i: (0, 0)),
            pl.BlockSpec((C_out, 1), lambda i: (0, 0)),
        ],
        out_specs=pl.BlockSpec((B * C_out, NLP), lambda i: (0, 0)),
        scratch_shapes=[pltpu.VMEM((R + 1, NLP), jnp.float32)],
        compiler_params=pltpu.CompilerParams(dimension_semantics=("arbitrary",)),
    )(x_slab, lane_mask, packed["wtap"], packed["wres"], packed["rb"])

    muti = out_slab.reshape(B * C_out, N, LP)[:, :, :L].transpose(1, 0, 2)
    return muti, inputs_esm2


# ----------------------------- parameter setup -------------------------------

def _init_conv_bn(key, c_in, c_out, k):
    kw, kb = jax.random.split(key)
    bound = 1.0 / float(c_in * k) ** 0.5
    return dict(
        w=jax.random.uniform(kw, (c_out, c_in, k), jnp.float32, -bound, bound),
        b=jax.random.uniform(kb, (c_out,), jnp.float32, -bound, bound),
        gamma=jnp.ones((c_out,), jnp.float32),
        beta=jnp.zeros((c_out,), jnp.float32),
        rm=jnp.zeros((c_out,), jnp.float32),
        rv=jnp.ones((c_out,), jnp.float32),
    )


def init_cnn_params(key, input_c, CNN_channel, num_layers, CNN_kernel_size):
    keys = jax.random.split(key, 3 * num_layers + 1)
    params = {"net1": [], "net2": [], "net3": []}
    for j in range(num_layers):
        c_in = input_c if j == 0 else CNN_channel[j - 1]
        c_out = CNN_channel[j]
        params["net1"].append(_init_conv_bn(keys[3 * j + 0], c_in, c_out, CNN_kernel_size[0]))
        params["net2"].append(_init_conv_bn(keys[3 * j + 1], c_in, c_out, CNN_kernel_size[1]))
        params["net3"].append(_init_conv_bn(keys[3 * j + 2], c_in, c_out, CNN_kernel_size[2]))
    params["res"] = _init_conv_bn(keys[-1], input_c, CNN_channel[-1], 1)
    return params


def pack_cnn_params(params, input_c, CNN_channel, CNN_kernel_size):
    """One-time host-side repack into the fused per-tap, BN-folded layout."""
    assert all(k % 2 == 1 for k in CNN_kernel_size), "odd kernel sizes required for 'same' conv"
    num_layers = len(params["net1"])
    B = 3
    C = int(max([input_c] + list(CNN_channel)))
    K = int(max(CNN_kernel_size))
    C_out = int(CNN_channel[-1])
    pad = (K - 1) // 2
    R = B * C

    # wtap[j, k]: (R, R+1) per-tap matrix.  BN scale folded into rows; folded bias
    # placed in column R of the center tap (applied against the slab's ones row).
    wtap = np.zeros((num_layers, K, R, R + 1), np.float32)
    for j in range(num_layers):
        c_in_j = input_c if j == 0 else int(CNN_channel[j - 1])
        for b, net in enumerate(("net1", "net2", "net3")):
            p = params[net][j]
            w = np.asarray(p["w"], np.float32)                     # (c_out_j, c_in_j, Kb)
            c_out_j, _, Kb = w.shape
            off = (K - Kb) // 2                                    # center the taps
            s = np.asarray(p["gamma"]) / np.sqrt(np.asarray(p["rv"]) + BN_EPS)
            t = s * (np.asarray(p["b"]) - np.asarray(p["rm"])) + np.asarray(p["beta"])
            row0 = b * C
            col0 = 0 if j == 0 else b * C      # layer 0: all branches read the shared input block
            for k in range(Kb):
                wtap[j, k + off, row0:row0 + c_out_j, col0:col0 + c_in_j] = s[:, None] * w[:, :, k]
            wtap[j, pad, row0:row0 + c_out_j, R] = t

    pr = params["res"]
    s = np.asarray(pr["gamma"]) / np.sqrt(np.asarray(pr["rv"]) + BN_EPS)
    wres = s[:, None] * np.asarray(pr["w"], np.float32)[:, :, 0]   # (C_out, input_c), scale folded
    rb = (s * (np.asarray(pr["b"]) - np.asarray(pr["rm"])) + np.asarray(pr["beta"]))[:, None]

    return dict(
        wtap=jnp.asarray(wtap), wres=jnp.asarray(wres), rb=jnp.asarray(rb),
        C=C, K=K, C_out=C_out, num_layers=num_layers,
        use_res_conv=(input_c != C_out))


# -------------------------- pure-JAX reference (check) -----------------------

def cnn_forward_reference(params, inputs_hybrid, inputs_esm2, input_c, CNN_channel):
    def conv_bn(x, p):
        k = p["w"].shape[-1]
        pad = (k - 1) // 2
        y = jax.lax.conv_general_dilated(
            x, p["w"], window_strides=(1,), padding=[(pad, pad)],
            dimension_numbers=("NCH", "OIH", "NCH"))
        y = y + p["b"][None, :, None]
        s = p["gamma"] / jnp.sqrt(p["rv"] + BN_EPS)
        return s[None, :, None] * (y - p["rm"][None, :, None]) + p["beta"][None, :, None]

    s1 = s2 = s3 = inputs_hybrid
    for p1, p2, p3 in zip(params["net1"], params["net2"], params["net3"]):
        s1, s2, s3 = conv_bn(s1, p1), conv_bn(s2, p2), conv_bn(s3, p3)
    if input_c != CNN_channel[-1]:
        res = conv_bn(inputs_hybrid, params["res"])
    else:
        res = inputs_hybrid
    lrelu = lambda v: jnp.where(v >= 0, v, NEG_SLOPE * v)
    muti = jnp.concatenate([lrelu(res + s1), lrelu(res + s2), lrelu(res + s3)], axis=1)
    return muti, inputs_esm2


# ---------------------------------- driver -----------------------------------

if __name__ == "__main__":
    input_c = 4
    CNN_channel = [8, 8]
    num_layers = 2
    CNN_kernel_size = [3, 5, 7]
    N, L = 2, 16

    key = jax.random.PRNGKey(0)
    k_params, k_hyb, k_esm = jax.random.split(key, 3)
    params = init_cnn_params(k_params, input_c, CNN_channel, num_layers, CNN_kernel_size)
    packed = pack_cnn_params(params, input_c, CNN_channel, CNN_kernel_size)

    inputs_hybrid = jax.random.normal(k_hyb, (N, input_c, L), jnp.float32)
    inputs_esm2 = jax.random.normal(k_esm, (N, 8, L), jnp.float32)

    muti, esm_out = cnn_forward(packed, inputs_hybrid, inputs_esm2)
    muti, esm_out = jax.block_until_ready((muti, esm_out))

    assert muti.shape == (N, 3 * CNN_channel[-1], L), muti.shape
    assert esm_out.shape == inputs_esm2.shape

    ref_muti, _ = cnn_forward_reference(params, inputs_hybrid, inputs_esm2,
                                        input_c, CNN_channel)
    err = float(jnp.max(jnp.abs(muti - ref_muti)))
    assert jnp.allclose(muti, ref_muti, rtol=1e-4, atol=1e-4), f"max abs err {err}"

    print("KERNEL_OK")
</pallas_src>

<mosaic_0001>
module attributes {stable_mosaic.version = 11 : i64} {
  func.func @_fused_cnn_kernel(%arg0: i32, %arg1: memref<4x256xf32, #tpu.memory_space<vmem>>, %arg2: memref<1x256xf32, #tpu.memory_space<vmem>>, %arg3: memref<2x7x24x25xf32, #tpu.memory_space<vmem>>, %arg4: memref<8x4xf32, #tpu.memory_space<vmem>>, %arg5: memref<8x1xf32, #tpu.memory_space<vmem>>, %arg6: memref<24x256xf32, #tpu.memory_space<vmem>>, %arg7: memref<25x256xf32, #tpu.memory_space<vmem>>) attributes {dimension_semantics = [#tpu.dimension_semantics<arbitrary>], iteration_bounds = array<i64: 1>, scalar_prefetch = 0 : i64, scratch_operands = 1 : i64, tpu.core_type = #tpu.core_type<tc>, window_params = [{pipeline_mode = #tpu.pipeline_mode<synchronous>, transform_indices = @transform_0, window_bounds = array<i64: 4, 256>}, {pipeline_mode = #tpu.pipeline_mode<synchronous>, transform_indices = @transform_1, window_bounds = array<i64: 1, 256>}, {pipeline_mode = #tpu.pipeline_mode<synchronous>, transform_indices = @transform_2, window_bounds = array<i64: 2, 7, 24, 25>}, {pipeline_mode = #tpu.pipeline_mode<synchronous>, transform_indices = @transform_3, window_bounds = array<i64: 8, 4>}, {pipeline_mode = #tpu.pipeline_mode<synchronous>, transform_indices = @transform_4, window_bounds = array<i64: 8, 1>}, {pipeline_mode = #tpu.pipeline_mode<synchronous>, transform_indices = @transform_5, window_bounds = array<i64: 24, 256>}]} {
    %c0 = arith.constant 0 : index
    %c0_0 = arith.constant 0 : index
    %0 = vector.load %arg2[%c0, %c0_0] : memref<1x256xf32, #tpu.memory_space<vmem>>, vector<1x256xf32>
    %c0_1 = arith.constant 0 : index
    %c0_2 = arith.constant 0 : index
    %1 = vector.load %arg1[%c0_1, %c0_2] : memref<4x256xf32, #tpu.memory_space<vmem>>, vector<4x256xf32>
    %c0_3 = arith.constant 0 : index
    %c0_4 = arith.constant 0 : index
    %2 = vector.load %arg4[%c0_3, %c0_4] : memref<8x4xf32, #tpu.memory_space<vmem>>, vector<8x4xf32>
    %cst = arith.constant dense<0.000000e+00> : vector<8x256xf32>
    %3 = tpu.matmul %2, %1, %cst {dimension_numbers = #tpu.dot_dimension_numbers<[1], [0], [0], [1], [0, 0, 1, 1], [], []>} : vector<8x4xf32>, vector<4x256xf32>, vector<8x256xf32> -> vector<8x256xf32>
    %c0_5 = arith.constant 0 : index
    %c0_6 = arith.constant 0 : index
    %4 = vector.load %arg5[%c0_5, %c0_6] : memref<8x1xf32, #tpu.memory_space<vmem>>, vector<8x1xf32>
    %5 = vector.broadcast %4 : vector<8x1xf32> to vector<8x256xf32>
    %6 = arith.addf %3, %5 : vector<8x256xf32>
    %cst_7 = arith.constant 0.000000e+00 : f32
    %7 = vector.broadcast %cst_7 : f32 to vector<25x256xf32>
    %c0_8 = arith.constant 0 : index
    %c0_9 = arith.constant 0 : index
    %8 = vector.load %arg7[%c0_8, %c0_9] : memref<25x256xf32, #tpu.memory_space<vmem>>, vector<25x256xf32>
    tpu.vector_store %arg7[%c0_8, %c0_9], %7 {strides = array<i32>} : memref<25x256xf32, #tpu.memory_space<vmem>>, vector<25x256xf32>,
    %c0_10 = arith.constant 0 : index
    %c0_11 = arith.constant 0 : index
    %9 = vector.load %arg7[%c0_10, %c0_11] : memref<25x256xf32, #tpu.memory_space<vmem>>, vector<4x256xf32>
    tpu.vector_store %arg7[%c0_10, %c0_11], %1 {strides = array<i32>} : memref<25x256xf32, #tpu.memory_space<vmem>>, vector<4x256xf32>,
    %c24 = arith.constant 24 : index
    %c0_12 = arith.constant 0 : index
    %10 = vector.load %arg7[%c24, %c0_12] : memref<25x256xf32, #tpu.memory_space<vmem>>, vector<1x256xf32>
    tpu.vector_store %arg7[%c24, %c0_12], %0 {strides = array<i32>} : memref<25x256xf32, #tpu.memory_space<vmem>>, vector<1x256xf32>,
    %c0_13 = arith.constant 0 : index
    %c0_14 = arith.constant 0 : index
    %11 = vector.load %arg7[%c0_13, %c0_14] : memref<25x256xf32, #tpu.memory_space<vmem>>, vector<25x256xf32>
    %c3_i32 = arith.constant 3 : i32
    %12 = tpu.dynamic_rotate %11 by %c3_i32 dim 1 : vector<25x256xf32>, i32 -> vector<25x256xf32>
    %c0_15 = arith.constant 0 : index
    %c0_16 = arith.constant 0 : index
    %c0_17 = arith.constant 0 : index
    %c0_18 = arith.constant 0 : index
    %13 = vector.load %arg3[%c0_15, %c0_16, %c0_17, %c0_18] : memref<2x7x24x25xf32, #tpu.memory_space<vmem>>, vector<1x1x24x25xf32>
    %14 = vector.shape_cast %13 : vector<1x1x24x25xf32> to vector<24x25xf32>
    %cst_19 = arith.constant dense<0.000000e+00> : vector<24x256xf32>
    %15 = tpu.matmul %14, %12, %cst_19 {dimension_numbers = #tpu.dot_dimension_numbers<[1], [0], [0], [1], [0, 0, 1, 1], [], []>} : vector<24x25xf32>, vector<25x256xf32>, vector<24x256xf32> -> vector<24x256xf32>
    %c2_i32 = arith.constant 2 : i32
    %16 = tpu.dynamic_rotate %11 by %c2_i32 dim 1 : vector<25x256xf32>, i32 -> vector<25x256xf32>
    %c0_20 = arith.constant 0 : index
    %c1 = arith.constant 1 : index
    %c0_21 = arith.constant 0 : index
    %c0_22 = arith.constant 0 : index
    %17 = vector.load %arg3[%c0_20, %c1, %c0_21, %c0_22] : memref<2x7x24x25xf32, #tpu.memory_space<vmem>>, vector<1x1x24x25xf32>
    %18 = vector.shape_cast %17 : vector<1x1x24x25xf32> to vector<24x25xf32>
    %cst_23 = arith.constant dense<0.000000e+00> : vector<24x256xf32>
    %19 = tpu.matmul %18, %16, %cst_23 {dimension_numbers = #tpu.dot_dimension_numbers<[1], [0], [0], [1], [0, 0, 1, 1], [], []>} : vector<24x25xf32>, vector<25x256xf32>, vector<24x256xf32> -> vector<24x256xf32>
    %20 = arith.addf %15, %19 : vector<24x256xf32>
    %c1_i32 = arith.constant 1 : i32
    %21 = tpu.dynamic_rotate %11 by %c1_i32 dim 1 : vector<25x256xf32>, i32 -> vector<25x256xf32>
    %c0_24 = arith.constant 0 : index
    %c2 = arith.constant 2 : index
    %c0_25 = arith.constant 0 : index
    %c0_26 = arith.constant 0 : index
    %22 = vector.load %arg3[%c0_24, %c2, %c0_25, %c0_26] : memref<2x7x24x25xf32, #tpu.memory_space<vmem>>, vector<1x1x24x25xf32>
    %23 = vector.shape_cast %22 : vector<1x1x24x25xf32> to vector<24x25xf32>
    %cst_27 = arith.constant dense<0.000000e+00> : vector<24x256xf32>
    %24 = tpu.matmul %23, %21, %cst_27 {dimension_numbers = #tpu.dot_dimension_numbers<[1], [0], [0], [1], [0, 0, 1, 1], [], []>} : vector<24x25xf32>, vector<25x256xf32>, vector<24x256xf32> -> vector<24x256xf32>
    %25 = arith.addf %20, %24 : vector<24x256xf32>
    %c0_28 = arith.constant 0 : index
    %c3 = arith.constant 3 : index
    %c0_29 = arith.constant 0 : index
    %c0_30 = arith.constant 0 : index
    %26 = vector.load %arg3[%c0_28, %c3, %c0_29, %c0_30] : memref<2x7x24x25xf32, #tpu.memory_space<vmem>>, vector<1x1x24x25xf32>
    %27 = vector.shape_cast %26 : vector<1x1x24x25xf32> to vector<24x25xf32>
    %cst_31 = arith.constant dense<0.000000e+00> : vector<24x256xf32>
    %28 = tpu.matmul %27, %11, %cst_31 {dimension_numbers = #tpu.dot_dimension_numbers<[1], [0], [0], [1], [0, 0, 1, 1], [], []>} : vector<24x25xf32>, vector<25x256xf32>, vector<24x256xf32> -> vector<24x256xf32>
    %29 = arith.addf %25, %28 : vector<24x256xf32>
    %c255_i32 = arith.constant 255 : i32
    %30 = tpu.dynamic_rotate %11 by %c255_i32 dim 1 : vector<25x256xf32>, i32 -> vector<25x256xf32>
    %c0_32 = arith.constant 0 : index
    %c4 = arith.constant 4 : index
    %c0_33 = arith.constant 0 : index
    %c0_34 = arith.constant 0 : index
    %31 = vector.load %arg3[%c0_32, %c4, %c0_33, %c0_34] : memref<2x7x24x25xf32, #tpu.memory_space<vmem>>, vector<1x1x24x25xf32>
    %32 = vector.shape_cast %31 : vector<1x1x24x25xf32> to vector<24x25xf32>
    %cst_35 = arith.constant dense<0.000000e+00> : vector<24x256xf32>
    %33 = tpu.matmul %32, %30, %cst_35 {dimension_numbers = #tpu.dot_dimension_numbers<[1], [0], [0], [1], [0, 0, 1, 1], [], []>} : vector<24x25xf32>, vector<25x256xf32>, vector<24x256xf32> -> vector<24x256xf32>
    %34 = arith.addf %29, %33 : vector<24x256xf32>
    %c254_i32 = arith.constant 254 : i32
    %35 = tpu.dynamic_rotate %11 by %c254_i32 dim 1 : vector<25x256xf32>, i32 -> vector<25x256xf32>
    %c0_36 = arith.constant 0 : index
    %c5 = arith.constant 5 : index
    %c0_37 = arith.constant 0 : index
    %c0_38 = arith.constant 0 : index
    %36 = vector.load %arg3[%c0_36, %c5, %c0_37, %c0_38] : memref<2x7x24x25xf32, #tpu.memory_space<vmem>>, vector<1x1x24x25xf32>
    %37 = vector.shape_cast %36 : vector<1x1x24x25xf32> to vector<24x25xf32>
    %cst_39 = arith.constant dense<0.000000e+00> : vector<24x256xf32>
    %38 = tpu.matmul %37, %35, %cst_39 {dimension_numbers = #tpu.dot_dimension_numbers<[1], [0], [0], [1], [0, 0, 1, 1], [], []>} : vector<24x25xf32>, vector<25x256xf32>, vector<24x256xf32> -> vector<24x256xf32>
    %39 = arith.addf %34, %38 : vector<24x256xf32>
    %c253_i32 = arith.constant 253 : i32
    %40 = tpu.dynamic_rotate %11 by %c253_i32 dim 1 : vector<25x256xf32>, i32 -> vector<25x256xf32>
    %c0_40 = arith.constant 0 : index
    %c6 = arith.constant 6 : index
    %c0_41 = arith.constant 0 : index
    %c0_42 = arith.constant 0 : index
    %41 = vector.load %arg3[%c0_40, %c6, %c0_41, %c0_42] : memref<2x7x24x25xf32, #tpu.memory_space<vmem>>, vector<1x1x24x25xf32>
    %42 = vector.shape_cast %41 : vector<1x1x24x25xf32> to vector<24x25xf32>
    %cst_43 = arith.constant dense<0.000000e+00> : vector<24x256xf32>
    %43 = tpu.matmul %42, %40, %cst_43 {dimension_numbers = #tpu.dot_dimension_numbers<[1], [0], [0], [1], [0, 0, 1, 1], [], []>} : vector<24x25xf32>, vector<25x256xf32>, vector<24x256xf32> -> vector<24x256xf32>
    %44 = arith.addf %39, %43 : vector<24x256xf32>
    %45 = vector.broadcast %0 : vector<1x256xf32> to vector<24x256xf32>
    %46 = arith.mulf %44, %45 : vector<24x256xf32>
    %c0_44 = arith.constant 0 : index
    %c0_45 = arith.constant 0 : index
    %47 = vector.load %arg7[%c0_44, %c0_45] : memref<25x256xf32, #tpu.memory_space<vmem>>, vector<24x256xf32>
    tpu.vector_store %arg7[%c0_44, %c0_45], %46 {strides = array<i32>} : memref<25x256xf32, #tpu.memory_space<vmem>>, vector<24x256xf32>,
    %c0_46 = arith.constant 0 : index
    %c0_47 = arith.constant 0 : index
    %48 = vector.load %arg7[%c0_46, %c0_47] : memref<25x256xf32, #tpu.memory_space<vmem>>, vector<25x256xf32>
    %c3_i32_48 = arith.constant 3 : i32
    %49 = tpu.dynamic_rotate %48 by %c3_i32_48 dim 1 : vector<25x256xf32>, i32 -> vector<25x256xf32>
    %c1_49 = arith.constant 1 : index
    %c0_50 = arith.constant 0 : index
    %c0_51 = arith.constant 0 : index
    %c0_52 = arith.constant 0 : index
    %50 = vector.load %arg3[%c1_49, %c0_50, %c0_51, %c0_52] : memref<2x7x24x25xf32, #tpu.memory_space<vmem>>, vector<1x1x24x25xf32>
    %51 = vector.shape_cast %50 : vector<1x1x24x25xf32> to vector<24x25xf32>
    %cst_53 = arith.constant dense<0.000000e+00> : vector<24x256xf32>
    %52 = tpu.matmul %51, %49, %cst_53 {dimension_numbers = #tpu.dot_dimension_numbers<[1], [0], [0], [1], [0, 0, 1, 1], [], []>} : vector<24x25xf32>, vector<25x256xf32>, vector<24x256xf32> -> vector<24x256xf32>
    %c2_i32_54 = arith.constant 2 : i32
    %53 = tpu.dynamic_rotate %48 by %c2_i32_54 dim 1 : vector<25x256xf32>, i32 -> vector<25x256xf32>
    %c1_55 = arith.constant 1 : index
    %c1_56 = arith.constant 1 : index
    %c0_57 = arith.constant 0 : index
    %c0_58 = arith.constant 0 : index
    %54 = vector.load %arg3[%c1_55, %c1_56, %c0_57, %c0_58] : memref<2x7x24x25xf32, #tpu.memory_space<vmem>>, vector<1x1x24x25xf32>
    %55 = vector.shape_cast %54 : vector<1x1x24x25xf32> to vector<24x25xf32>
    %cst_59 = arith.constant dense<0.000000e+00> : vector<24x256xf32>
    %56 = tpu.matmul %55, %53, %cst_59 {dimension_numbers = #tpu.dot_dimension_numbers<[1], [0], [0], [1], [0, 0, 1, 1], [], []>} : vector<24x25xf32>, vector<25x256xf32>, vector<24x256xf32> -> vector<24x256xf32>
    %57 = arith.addf %52, %56 : vector<24x256xf32>
    %c1_i32_60 = arith.constant 1 : i32
    %58 = tpu.dynamic_rotate %48 by %c1_i32_60 dim 1 : vector<25x256xf32>, i32 -> vector<25x256xf32>
    %c1_61 = arith.constant 1 : index
    %c2_62 = arith.constant 2 : index
    %c0_63 = arith.constant 0 : index
    %c0_64 = arith.constant 0 : index
    %59 = vector.load %arg3[%c1_61, %c2_62, %c0_63, %c0_64] : memref<2x7x24x25xf32, #tpu.memory_space<vmem>>, vector<1x1x24x25xf32>
    %60 = vector.shape_cast %59 : vector<1x1x24x25xf32> to vector<24x25xf32>
    %cst_65 = arith.constant dense<0.000000e+00> : vector<24x256xf32>
    %61 = tpu.matmul %60, %58, %cst_65 {dimension_numbers = #tpu.dot_dimension_numbers<[1], [0], [0], [1], [0, 0, 1, 1], [], []>} : vector<24x25xf32>, vector<25x256xf32>, vector<24x256xf32> -> vector<24x256xf32>
    %62 = arith.addf %57, %61 : vector<24x256xf32>
    %c1_66 = arith.constant 1 : index
    %c3_67 = arith.constant 3 : index
    %c0_68 = arith.constant 0 : index
    %c0_69 = arith.constant 0 : index
    %63 = vector.load %arg3[%c1_66, %c3_67, %c0_68, %c0_69] : memref<2x7x24x25xf32, #tpu.memory_space<vmem>>, vector<1x1x24x25xf32>
    %64 = vector.shape_cast %63 : vector<1x1x24x25xf32> to vector<24x25xf32>
    %cst_70 = arith.constant dense<0.000000e+00> : vector<24x256xf32>
    %65 = tpu.matmul %64, %48, %cst_70 {dimension_numbers = #tpu.dot_dimension_numbers<[1], [0], [0], [1], [0, 0, 1, 1], [], []>} : vector<24x25xf32>, vector<25x256xf32>, vector<24x256xf32> -> vector<24x256xf32>
    %66 = arith.addf %62, %65 : vector<24x256xf32>
    %c255_i32_71 = arith.constant 255 : i32
    %67 = tpu.dynamic_rotate %48 by %c255_i32_71 dim 1 : vector<25x256xf32>, i32 -> vector<25x256xf32>
    %c1_72 = arith.constant 1 : index
    %c4_73 = arith.constant 4 : index
    %c0_74 = arith.constant 0 : index
    %c0_75 = arith.constant 0 : index
    %68 = vector.load %arg3[%c1_72, %c4_73, %c0_74, %c0_75] : memref<2x7x24x25xf32, #tpu.memory_space<vmem>>, vector<1x1x24x25xf32>
    %69 = vector.shape_cast %68 : vector<1x1x24x25xf32> to vector<24x25xf32>
    %cst_76 = arith.constant dense<0.000000e+00> : vector<24x256xf32>
    %70 = tpu.matmul %69, %67, %cst_76 {dimension_numbers = #tpu.dot_dimension_numbers<[1], [0], [0], [1], [0, 0, 1, 1], [], []>} : vector<24x25xf32>, vector<25x256xf32>, vector<24x256xf32> -> vector<24x256xf32>
    %71 = arith.addf %66, %70 : vector<24x256xf32>
    %c254_i32_77 = arith.constant 254 : i32
    %72 = tpu.dynamic_rotate %48 by %c254_i32_77 dim 1 : vector<25x256xf32>, i32 -> vector<25x256xf32>
    %c1_78 = arith.constant 1 : index
    %c5_79 = arith.constant 5 : index
    %c0_80 = arith.constant 0 : index
    %c0_81 = arith.constant 0 : index
    %73 = vector.load %arg3[%c1_78, %c5_79, %c0_80, %c0_81] : memref<2x7x24x25xf32, #tpu.memory_space<vmem>>, vector<1x1x24x25xf32>
    %74 = vector.shape_cast %73 : vector<1x1x24x25xf32> to vector<24x25xf32>
    %cst_82 = arith.constant dense<0.000000e+00> : vector<24x256xf32>
    %75 = tpu.matmul %74, %72, %cst_82 {dimension_numbers = #tpu.dot_dimension_numbers<[1], [0], [0], [1], [0, 0, 1, 1], [], []>} : vector<24x25xf32>, vector<25x256xf32>, vector<24x256xf32> -> vector<24x256xf32>
    %76 = arith.addf %71, %75 : vector<24x256xf32>
    %c253_i32_83 = arith.constant 253 : i32
    %77 = tpu.dynamic_rotate %48 by %c253_i32_83 dim 1 : vector<25x256xf32>, i32 -> vector<25x256xf32>
    %c1_84 = arith.constant 1 : index
    %c6_85 = arith.constant 6 : index
    %c0_86 = arith.constant 0 : index
    %c0_87 = arith.constant 0 : index
    %78 = vector.load %arg3[%c1_84, %c6_85, %c0_86, %c0_87] : memref<2x7x24x25xf32, #tpu.memory_space<vmem>>, vector<1x1x24x25xf32>
    %79 = vector.shape_cast %78 : vector<1x1x24x25xf32> to vector<24x25xf32>
    %cst_88 = arith.constant dense<0.000000e+00> : vector<24x256xf32>
    %80 = tpu.matmul %79, %77, %cst_88 {dimension_numbers = #tpu.dot_dimension_numbers<[1], [0], [0], [1], [0, 0, 1, 1], [], []>} : vector<24x25xf32>, vector<25x256xf32>, vector<24x256xf32> -> vector<24x256xf32>
    %81 = arith.addf %76, %80 : vector<24x256xf32>
    %82 = vector.extract_strided_slice %81 {offsets = [0, 0], sizes = [8, 256], strides = [1, 1]} : vector<24x256xf32> to vector<8x256xf32>
    %83 = arith.addf %82, %6 : vector<8x256xf32>
    %cst_89 = arith.constant 0.000000e+00 : f32
    %84 = vector.broadcast %cst_89 : f32 to vector<8x256xf32>
    %85 = arith.cmpf oge, %83, %84 : vector<8x256xf32>
    %cst_90 = arith.constant 0.00999999977 : f32
    %86 = vector.broadcast %cst_90 : f32 to vector<8x256xf32>
    %87 = arith.mulf %86, %83 : vector<8x256xf32>
    %88 = arith.select %85, %83, %87 : vector<8x256xi1>, vector<8x256xf32>
    %c0_91 = arith.constant 0 : index
    %c0_92 = arith.constant 0 : index
    %89 = vector.load %arg6[%c0_91, %c0_92] : memref<24x256xf32, #tpu.memory_space<vmem>>, vector<8x256xf32>
    tpu.vector_store %arg6[%c0_91, %c0_92], %88 {strides = array<i32>} : memref<24x256xf32, #tpu.memory_space<vmem>>, vector<8x256xf32>,
    %90 = vector.extract_strided_slice %81 {offsets = [8, 0], sizes = [8, 256], strides = [1, 1]} : vector<24x256xf32> to vector<8x256xf32>
    %91 = arith.addf %90, %6 : vector<8x256xf32>
    %cst_93 = arith.constant 0.000000e+00 : f32
    %92 = vector.broadcast %cst_93 : f32 to vector<8x256xf32>
    %93 = arith.cmpf oge, %91, %92 : vector<8x256xf32>
    %cst_94 = arith.constant 0.00999999977 : f32
    %94 = vector.broadcast %cst_94 : f32 to vector<8x256xf32>
    %95 = arith.mulf %94, %91 : vector<8x256xf32>
    %96 = arith.select %93, %91, %95 : vector<8x256xi1>, vector<8x256xf32>
    %c8 = arith.constant 8 : index
    %c0_95 = arith.constant 0 : index
    %97 = vector.load %arg6[%c8, %c0_95] : memref<24x256xf32, #tpu.memory_space<vmem>>, vector<8x256xf32>
    tpu.vector_store %arg6[%c8, %c0_95], %96 {strides = array<i32>} : memref<24x256xf32, #tpu.memory_space<vmem>>, vector<8x256xf32>,
    %98 = vector.extract_strided_slice %81 {offsets = [16, 0], sizes = [8, 256], strides = [1, 1]} : vector<24x256xf32> to vector<8x256xf32>
    %99 = arith.addf %98, %6 : vector<8x256xf32>
    %cst_96 = arith.constant 0.000000e+00 : f32
    %100 = vector.broadcast %cst_96 : f32 to vector<8x256xf32>
    %101 = arith.cmpf oge, %99, %100 : vector<8x256xf32>
    %cst_97 = arith.constant 0.00999999977 : f32
    %102 = vector.broadcast %cst_97 : f32 to vector<8x256xf32>
    %103 = arith.mulf %102, %99 : vector<8x256xf32>
    %104 = arith.select %101, %99, %103 : vector<8x256xi1>, vector<8x256xf32>
    %c16 = arith.constant 16 : index
    %c0_98 = arith.constant 0 : index
    %105 = vector.load %arg6[%c16, %c0_98] : memref<24x256xf32, #tpu.memory_space<vmem>>, vector<8x256xf32>
    tpu.vector_store %arg6[%c16, %c0_98], %104 {strides = array<i32>} : memref<24x256xf32, #tpu.memory_space<vmem>>, vector<8x256xf32>,
    return
  }
  func.func @transform_0(%arg0: i32) -> (i32, i32) {
    %c0_i32 = arith.constant 0 : i32
    %c0_i32_0 = arith.constant 0 : i32
    %c0_i32_1 = arith.constant 0 : i32
    return %c0_i32, %c0_i32_0 : i32, i32
  }
  func.func @transform_1(%arg0: i32) -> (i32, i32) {
    %c0_i32 = arith.constant 0 : i32
    %c0_i32_0 = arith.constant 0 : i32
    %c0_i32_1 = arith.constant 0 : i32
    return %c0_i32, %c0_i32_0 : i32, i32
  }
  func.func @transform_2(%arg0: i32) -> (i32, i32, i32, i32) {
    %c0_i32 = arith.constant 0 : i32
    %c0_i32_0 = arith.constant 0 : i32
    %c0_i32_1 = arith.constant 0 : i32
    %c0_i32_2 = arith.constant 0 : i32
    %c0_i32_3 = arith.constant 0 : i32
    return %c0_i32, %c0_i32_0, %c0_i32_1, %c0_i32_2 : i32, i32, i32, i32
  }
  func.func @transform_3(%arg0: i32) -> (i32, i32) {
    %c0_i32 = arith.constant 0 : i32
    %c0_i32_0 = arith.constant 0 : i32
    %c0_i32_1 = arith.constant 0 : i32
    return %c0_i32, %c0_i32_0 : i32, i32
  }
  func.func @transform_4(%arg0: i32) -> (i32, i32) {
    %c0_i32 = arith.constant 0 : i32
    %c0_i32_0 = arith.constant 0 : i32
    %c0_i32_1 = arith.constant 0 : i32
    return %c0_i32, %c0_i32_0 : i32, i32
  }
  func.func @transform_5(%arg0: i32) -> (i32, i32) {
    %c0_i32 = arith.constant 0 : i32
    %c0_i32_0 = arith.constant 0 : i32
    %c0_i32_1 = arith.constant 0 : i32
    return %c0_i32, %c0_i32_0 : i32, i32
  }
}

</mosaic_0001>

<llo_original>
// kernel: tpu_custom_call.1
$region0: #{tpu_custom_call.1}
  #allocation0 [shape = 'u32[]', space=smem, size = 0x4, offset = 0x4, fixed_abs, tag = 'smem constant byte address 0x4 - core index']
  #allocation1 [shape = 'u32[144,128]{1,0:T(1,128)}', space=vmem, size = 0x12000, scoped, tag = 'internal scratch']
  #allocation2 [shape = 'f32[25,256]{1,0:T(8,128)}', space=vmem, size = 0x8000, scoped, tag = 'scratch operand']
  %s0 = inlined_call_operand.vmem [shape: f32[4,256], index: 0, kind: input, shape index: {}]
  %s1 = inlined_call_operand.vmem [shape: f32[1,256], index: 1, kind: input, shape index: {}]
  %s2 = inlined_call_operand.hbm [shape: f32[2,7,24,25], index: 2, kind: input, shape index: {}]
  %s3 = inlined_call_operand.vmem [shape: f32[8,4], index: 3, kind: input, shape index: {}]
  %s4 = inlined_call_operand.vmem [shape: f32[8,1], index: 4, kind: input, shape index: {}]
  %s5 = inlined_call_operand.hbm [shape: f32[24,256], index: 5, kind: output, shape index: {}]
  %s6 = sld [smem:[#allocation0]]
  $region34: #{tpu_custom_call.1} parent=0
    _
  %s8 = ssub.s32 1, %s6
  %s9 = scalar_select 0, %s8, %s6
  $region1: #{tpu_custom_call.1} parent=0
    #allocation3 [shape = 'u8[172032]{0}', space=vmem, size = 0x2a000, scoped, tag = 'input window, operand 2, single buffered']
    #allocation4 [shape = 's32[1]{0}', space=sflag, size = 0x4, scoped, tag = 'scoped memory for tpu_custom_call.1']
    #allocation5 [shape = 's32[1]{0}', space=sflag, size = 0x4, scoped, tag = 'scoped memory for tpu_custom_call.1']
    #allocation6 [shape = 'u8[24576]{0}', space=vmem, size = 0x6000, scoped, tag = 'output window, operand 0, single buffered']
    %10 = vsyncpa [#allocation4], 0
    %11 = vsyncpa [#allocation5], 0
    // Predicated region
    $region2: #{tpu_custom_call.1} parent=1 // pred_check
      _
    $region3: #{tpu_custom_call.1} parent=1 // pred_check_branch
      %13 = sbr.rel (0) target = $region5
    $region4: #{tpu_custom_call.1} parent=1 // pred_region
      _
    $region5: #{tpu_custom_call.1} parent=1 // pred_fallthru
      _
    // Predicated region
    $region6: #{tpu_custom_call.1} parent=1 // pred_check
      _
    $region7: #{tpu_custom_call.1} parent=1 // pred_check_branch
      %15 = sbr.rel (0) target = $region9
    $region8: #{tpu_custom_call.1} parent=1 // pred_region
      _
    $region9: #{tpu_custom_call.1} parent=1 // pred_fallthru
      _
    // Predicated region
    $region10: #{tpu_custom_call.1} parent=1 // pred_check
      _
    $region11: #{tpu_custom_call.1} parent=1 // pred_check_branch
      %17 = sbr.rel (0) target = $region13
    $region12: #{tpu_custom_call.1} parent=1 // pred_region
      %s19 = ssub.s32 5376, 5376
      %20 = vsyncadd [#allocation4], %s19
      %s21 = sshll.u32 [#allocation3], 4
      %s22 = int_to_ptr.vmem [resolvable:$true] %s21
      %27 = dma.hbm_to_vmem [thread:$0]  %s2, 5376, %s22, [#allocation4], 128, 128, 8
    $region13: #{tpu_custom_call.1} parent=1 // pred_fallthru
      _
    // Predicated region
    $region14: #{tpu_custom_call.1} parent=1 // pred_check
      _
    $region15: #{tpu_custom_call.1} parent=1 // pred_check_branch
      %29 = sbr.rel (0) target = $region17
    $region16: #{tpu_custom_call.1} parent=1 // pred_region
      _
    $region17: #{tpu_custom_call.1} parent=1 // pred_fallthru
      _
    // Predicated region
    $region18: #{tpu_custom_call.1} parent=1 // pred_check
      _
    $region19: #{tpu_custom_call.1} parent=1 // pred_check_branch
      %31 = sbr.rel (0) target = $region21
    $region20: #{tpu_custom_call.1} parent=1 // pred_region
      _
    $region21: #{tpu_custom_call.1} parent=1 // pred_fallthru
      _
    // Predicated region
    $region22: #{tpu_custom_call.1} parent=1 // pred_check
      _
    $region23: #{tpu_custom_call.1} parent=1 // pred_check_branch
      %33 = sbr.rel (0) target = $region25
    $region24: #{tpu_custom_call.1} parent=1 // pred_region
      %34 = dma.done [#allocation4], 5376
    $region25: #{tpu_custom_call.1} parent=1 // pred_fallthru
      _
    %v35 = vld [vmem:[%s1] sm:$0x3]
    %v36 = vld [vmem:[%s0] sm:$0xff]
    %v37 = vld [vmem:[%s3] sm:$0xff]
    %v38 = vld [vmem:[%s4] sm:$0xff]
    %40 = vset.pattern.permute.xlu0 0
    %41 = vperm.xlu0 %40, %v38
    %v42 = vpop.permute.xlu0 %41
    %v45 = vcombine.high %v36, %v36
    %vm46 = vcmask 31744
    %v48 = vsel %vm46, %v37, 0
    %vm50 = vcmask 1043456
    %v51 = vsel %vm50, %v36, 0
    %v53 = vsel %vm50, %v45, 0
    %55 = vmatprep.subr.mxu0 0.0
    %56 = vmatpush1.msra.mxu0 0.0
    %57 = vmatprep.subr.mxu0 0.0
    %58 = vmatpush1.msra.mxu0 0.0
    %59 = vmatprep.subr.mxu0 0.0
    %60 = vmatpush1.msra.mxu0 0.0
    %61 = vmatprep.subr.mxu0 0.0
    %62 = vmatpush1.msra.mxu0 0.0
    %63 = vmatprep.subr.mxu0 0.0
    %64 = vmatpush1.msra.mxu0 0.0
    %65 = vmatprep.subr.mxu0 0.0
    %66 = vmatpush1.msra.mxu0 0.0
    %67 = vmatprep.subr.mxu0 0.0
    %68 = vmatpush1.msra.mxu0 0.0
    %69 = vmatprep.subr.mxu0 0.0
    %70 = vmatpush1.msra.mxu0 0.0
    %71 = vmatprep.subr.mxu0 0.0
    %72 = vmatpush1.msra.mxu0 0.0
    %73 = vmatprep.subr.mxu0 0.0
    %74 = vmatpush1.msra.mxu0 0.0
    %75 = vmatprep.subr.mxu0 0.0
    %76 = vmatpush1.msra.mxu0 0.0
    %77 = vmatprep.subr.mxu0 0.0
    %78 = vmatpush1.msra.mxu0 0.0
    %79 = vmatprep.subr.mxu0 0.0
    %80 = vmatpush1.msra.mxu0 0.0
    %81 = vmatprep.subr.mxu0 0.0
    %82 = vmatpush1.msra.mxu0 0.0
    %83 = vmatprep.subr.mxu0 0.0
    %84 = vmatpush1.msra.mxu0 0.0
    %85 = vmatprep.subr.mxu0 %v53
    %86 = vmatpush1.msra.mxu0 %v51
    %87 = vmatprep.subr.mxu0 0.0
    %88 = vmatpush2.msra.mxu0 0.0
    %89 = vmatprep.subr.mxu0 0.0
    %90 = vmatpush2.msra.mxu0 0.0
    %91 = vmatprep.subr.mxu0 0.0
    %92 = vmatpush2.msra.mxu0 0.0
    %93 = vmatprep.subr.mxu0 0.0
    %94 = vmatpush2.msra.mxu0 0.0
    %95 = vmatprep.subr.mxu0 0.0
    %96 = vmatpush2.msra.mxu0 0.0
    %97 = vmatprep.subr.mxu0 0.0
    %98 = vmatpush2.msra.mxu0 0.0
    %99 = vmatprep.subr.mxu0 0.0
    %100 = vmatpush2.msra.mxu0 0.0
    %101 = vmatprep.subr.mxu0 0.0
    %102 = vmatpush2.msra.mxu0 0.0
    %103 = vmatprep.subr.mxu0 0.0
    %104 = vmatpush2.msra.mxu0 0.0
    %105 = vmatprep.subr.mxu0 0.0
    %106 = vmatpush2.msra.mxu0 0.0
    %107 = vmatprep.subr.mxu0 0.0
    %108 = vmatpush2.msra.mxu0 0.0
    %109 = vmatprep.subr.mxu0 0.0
    %110 = vmatpush2.msra.mxu0 0.0
    %111 = vmatprep.subr.mxu0 0.0
    %112 = vmatpush2.msra.mxu0 0.0
    %113 = vmatprep.subr.mxu0 0.0
    %114 = vmatpush2.msra.mxu0 0.0
    %115 = vmatprep.subr.mxu0 0.0
    %116 = vmatpush2.msra.mxu0 0.0
    %117 = vmatprep.subr.mxu0 0.0
    %118 = vmatpush2.msra.mxu0 0.0
    %119 = vmatprep.mubr.f32.mxu0 0.0
    %120 = vmatmul.mubr.f32.gmra.mxu0 %v48
    %v121 = vpop.f32.mrf.mxu0
    %v122 = vadd.f32 %v42, %v121
    %v123 = vpop.f32.mrf.mxu0
    %v124 = vadd.f32 %v42, %v123
    %125 = vdwg.mxu0
    %126 = vst [vmem:[#allocation2] sm:$0xff] 0.0
    %127 = vst [vmem:[#allocation2 + $0x8] sm:$0xff] 0.0
    %128 = vst [vmem:[#allocation2 + $0x10] sm:$0xff] 0.0
    %129 = vst [vmem:[#allocation2 + $0x18] sm:$0xff] 0.0
    %130 = vst [vmem:[#allocation2 + $0x20] sm:$0xff] 0.0
    %131 = vst [vmem:[#allocation2 + $0x28] sm:$0xff] 0.0
    %132 = vst [vmem:[#allocation2 + $0x30] sm:$0x1] 0.0
    %133 = vst [vmem:[#allocation2 + $0x38] sm:$0x1] 0.0
    %135 = vst [vmem:[#allocation2] sm:$0xf] %v36
    %136 = vst [vmem:[#allocation2 + $0x8] sm:$0xf] %v45
    %v137 = vlaneseq
    %vm138 = vcmp.ge.s32.totalorder %v137, 0
    %vm139 = vcmp.lt.s32.totalorder %v137, 256
    %vm140 = vmand %vm138, %vm139
    %s141 = scalar_lea.vmem [#allocation2], 48
    %142 = vst.msk [vmem:[%s141] ss:$8 sm:$0x3] %vm140, %v35
    %143 = vst.msk [vmem:[%s141] ss:$8 sm:$0x0] %vm140, %v35
    %v144 = vld [vmem:[#allocation2] sm:$0xff]
    %v145 = vld [vmem:[#allocation2 + $0x8] sm:$0xff]
    %v146 = vld [vmem:[#allocation2 + $0x10] sm:$0xff]
    %v147 = vld [vmem:[#allocation2 + $0x18] sm:$0xff]
    %v148 = vld [vmem:[#allocation2 + $0x20] sm:$0xff]
    %v149 = vld [vmem:[#allocation2 + $0x28] sm:$0xff]
    %v150 = vld [vmem:[#allocation2 + $0x30] sm:$0x1]
    %v151 = vld [vmem:[#allocation2 + $0x38] sm:$0x1]
    %152 = vrot.lane.b32.xlu0 %v144, 3
    %v153 = vpop.permute.xlu0 %152
    %154 = vrot.lane.b32.xlu0 %v146, 3
    %v155 = vpop.permute.xlu0 %154
    %156 = vrot.lane.b32.xlu0 %v148, 3
    %v157 = vpop.permute.xlu0 %156
    %158 = vrot.lane.b32.xlu0 %v150, 3
    %v159 = vpop.permute.xlu0 %158
    %160 = vrot.lane.b32.xlu0 %v145, 3
    %v161 = vpop.permute.xlu0 %160
    %162 = vrot.lane.b32.xlu0 %v147, 3
    %v163 = vpop.permute.xlu0 %162
    %164 = vrot.lane.b32.xlu0 %v149, 3
    %v165 = vpop.permute.xlu0 %164
    %166 = vrot.lane.b32.xlu0 %v151, 3
    %v167 = vpop.permute.xlu0 %166
    %v168 = vlaneseq
    %v169 = vand.u32 %v168, 127
    %vm170 = vcmp.lt.s32.totalorder %v169, 3
    %v171 = vsel %vm170, %v153, %v161
    %v172 = vsel %vm170, %v155, %v163
    %v173 = vsel %vm170, %v157, %v165
    %v174 = vsel %vm170, %v159, %v167
    %v175 = vsel %vm170, %v161, %v153
    %v176 = vsel %vm170, %v163, %v155
    %v177 = vsel %vm170, %v165, %v157
    %v178 = vsel %vm170, %v167, %v159
    %v179 = vld [vmem:[#allocation3] sm:$0xff]
    %v180 = vld [vmem:[#allocation3 + $0x8] sm:$0xff]
    %v181 = vld [vmem:[#allocation3 + $0x10] sm:$0xff]
    %182 = vrot.lane.b32.xlu0 %v144, 2
    %v183 = vpop.permute.xlu0 %182
    %184 = vrot.lane.b32.xlu0 %v146, 2
    %v185 = vpop.permute.xlu0 %184
    %186 = vrot.lane.b32.xlu0 %v148, 2
    %v187 = vpop.permute.xlu0 %186
    %188 = vrot.lane.b32.xlu0 %v150, 2
    %v189 = vpop.permute.xlu0 %188
    %190 = vrot.lane.b32.xlu0 %v145, 2
    %v191 = vpop.permute.xlu0 %190
    %192 = vrot.lane.b32.xlu0 %v147, 2
    %v193 = vpop.permute.xlu0 %192
    %194 = vrot.lane.b32.xlu0 %v149, 2
    %v195 = vpop.permute.xlu0 %194
    %196 = vrot.lane.b32.xlu0 %v151, 2
    %v197 = vpop.permute.xlu0 %196
    %vm198 = vcmp.lt.s32.totalorder %v169, 2
    %v199 = vsel %vm198, %v183, %v191
    %v200 = vsel %vm198, %v185, %v193
    %v201 = vsel %vm198, %v187, %v195
    %v202 = vsel %vm198, %v189, %v197
    %v203 = vsel %vm198, %v191, %v183
    %v204 = vsel %vm198, %v193, %v185
    %v205 = vsel %vm198, %v195, %v187
    %v206 = vsel %vm198, %v197, %v189
    %s207 = scalar_lea.vmem [#allocation3], 24
    %v208 = vld [vmem:[%s207] sm:$0xff]
    %v209 = vld [vmem:[%s207 + $0x8] sm:$0xff]
    %v210 = vld [vmem:[%s207 + $0x10] sm:$0xff]
    %vm211 = vcmask 203776
    %v213 = vsel %vm211, %v208, 0
    %v216 = vsel %vm211, %v209, 0
    %v219 = vsel %vm211, %v210, 0
    %vm221 = vcmask 1040384
    %v223 = vsel %vm221, %v206, 0
    %v226 = vsel %vm221, %v202, 0
    %228 = vmatprep.subr.mxu0 0.0
    %229 = vmatpush1.msra.mxu0 0.0
    %230 = vmatprep.subr.mxu0 0.0
    %231 = vmatpush1.msra.mxu0 0.0
    %232 = vmatprep.subr.mxu0 0.0
    %233 = vmatpush1.msra.mxu0 0.0
    %234 = vmatprep.subr.mxu0 0.0
    %235 = vmatpush1.msra.mxu0 0.0
    %236 = vmatprep.subr.mxu0 0.0
    %237 = vmatpush1.msra.mxu0 0.0
    %238 = vmatprep.subr.mxu0 0.0
    %239 = vmatpush1.msra.mxu0 0.0
    %240 = vmatprep.subr.mxu0 0.0
    %241 = vmatpush1.msra.mxu0 0.0
    %242 = vmatprep.subr.mxu0 0.0
    %243 = vmatpush1.msra.mxu0 0.0
    %244 = vmatprep.subr.mxu0 0.0
    %245 = vmatpush1.msra.mxu0 0.0
    %246 = vmatprep.subr.mxu0 0.0
    %247 = vmatpush1.msra.mxu0 0.0
    %248 = vmatprep.subr.mxu0 0.0
    %249 = vmatpush1.msra.mxu0 0.0
    %250 = vmatprep.subr.mxu0 0.0
    %251 = vmatpush1.msra.mxu0 0.0
    %252 = vmatprep.subr.mxu0 %v226
    %253 = vmatpush1.msra.mxu0 %v223
    %254 = vmatprep.subr.mxu0 %v201
    %255 = vmatpush1.msra.mxu0 %v205
    %256 = vmatprep.subr.mxu0 %v200
    %257 = vmatpush1.msra.mxu0 %v204
    %258 = vmatprep.subr.mxu0 %v199
    %259 = vmatpush1.msra.mxu0 %v203
    %260 = vmatprep.subr.mxu0 0.0
    %261 = vmatpush2.msra.mxu0 0.0
    %262 = vmatprep.subr.mxu0 0.0
    %263 = vmatpush2.msra.mxu0 0.0
    %264 = vmatprep.subr.mxu0 0.0
    %265 = vmatpush2.msra.mxu0 0.0
    %266 = vmatprep.subr.mxu0 0.0
    %267 = vmatpush2.msra.mxu0 0.0
    %268 = vmatprep.subr.mxu0 0.0
    %269 = vmatpush2.msra.mxu0 0.0
    %270 = vmatprep.subr.mxu0 0.0
    %271 = vmatpush2.msra.mxu0 0.0
    %272 = vmatprep.subr.mxu0 0.0
    %273 = vmatpush2.msra.mxu0 0.0
    %274 = vmatprep.subr.mxu0 0.0
    %275 = vmatpush2.msra.mxu0 0.0
    %276 = vmatprep.subr.mxu0 0.0
    %277 = vmatpush2.msra.mxu0 0.0
    %278 = vmatprep.subr.mxu0 0.0
    %279 = vmatpush2.msra.mxu0 0.0
    %280 = vmatprep.subr.mxu0 0.0
    %281 = vmatpush2.msra.mxu0 0.0
    %282 = vmatprep.subr.mxu0 0.0
    %283 = vmatpush2.msra.mxu0 0.0
    %284 = vmatprep.subr.mxu0 0.0
    %285 = vmatpush2.msra.mxu0 0.0
    %286 = vmatprep.subr.mxu0 0.0
    %287 = vmatpush2.msra.mxu0 0.0
    %288 = vmatprep.subr.mxu0 0.0
    %289 = vmatpush2.msra.mxu0 0.0
    %290 = vmatprep.subr.mxu0 0.0
    %291 = vmatpush2.msra.mxu0 0.0
    %292 = vmatprep.mubr.f32.mxu0 0.0
    %293 = vmatmul.mubr.f32.gmra.mxu0 %v213
    %v294 = vpop.f32.mrf.mxu0
    %v295 = vadd.f32 0.0, %v294
    %v296 = vpop.f32.mrf.mxu0
    %v297 = vadd.f32 0.0, %v296
    %298 = vmatprep.mubr.f32.mxu0 0.0
    %299 = vmatmul.mubr.f32.gmra.mxu0 %v216
    %v300 = vpop.f32.mrf.mxu0
    %v301 = vadd.f32 0.0, %v300
    %v302 = vpop.f32.mrf.mxu0
    %v303 = vadd.f32 0.0, %v302
    %304 = vmatprep.mubr.f32.mxu0 0.0
    %305 = vmatmul.mubr.f32.gmra.mxu0 %v219
    %v306 = vpop.f32.mrf.mxu0
    %v307 = vadd.f32 0.0, %v306
    %v308 = vpop.f32.mrf.mxu0
    %v309 = vadd.f32 0.0, %v308
    %310 = vdwg.mxu0
    %v312 = vsel %vm211, %v179, 0
    %v315 = vsel %vm211, %v180, 0
    %v318 = vsel %vm211, %v181, 0
    %v321 = vsel %vm221, %v178, 0
    %v324 = vsel %vm221, %v174, 0
    %326 = vmatprep.subr.mxu0 0.0
    %327 = vmatpush1.msra.mxu0 0.0
    %328 = vmatprep.subr.mxu0 0.0
    %329 = vmatpush1.msra.mxu0 0.0
    %330 = vmatprep.subr.mxu0 0.0
    %331 = vmatpush1.msra.mxu0 0.0
    %332 = vmatprep.subr.mxu0 0.0
    %333 = vmatpush1.msra.mxu0 0.0
    %334 = vmatprep.subr.mxu0 0.0
    %335 = vmatpush1.msra.mxu0 0.0
    %336 = vmatprep.subr.mxu0 0.0
    %337 = vmatpush1.msra.mxu0 0.0
    %338 = vmatprep.subr.mxu0 0.0
    %339 = vmatpush1.msra.mxu0 0.0
    %340 = vmatprep.subr.mxu0 0.0
    %341 = vmatpush1.msra.mxu0 0.0
    %342 = vmatprep.subr.mxu0 0.0
    %343 = vmatpush1.msra.mxu0 0.0
    %344 = vmatprep.subr.mxu0 0.0
    %345 = vmatpush1.msra.mxu0 0.0
    %346 = vmatprep.subr.mxu0 0.0
    %347 = vmatpush1.msra.mxu0 0.0
    %348 = vmatprep.subr.mxu0 0.0
    %349 = vmatpush1.msra.mxu0 0.0
    %350 = vmatprep.subr.mxu0 %v324
    %351 = vmatpush1.msra.mxu0 %v321
    %352 = vmatprep.subr.mxu0 %v173
    %353 = vmatpush1.msra.mxu0 %v177
    %354 = vmatprep.subr.mxu0 %v172
    %355 = vmatpush1.msra.mxu0 %v176
    %356 = vmatprep.subr.mxu0 %v171
    %357 = vmatpush1.msra.mxu0 %v175
    %358 = vmatprep.subr.mxu0 0.0
    %359 = vmatpush2.msra.mxu0 0.0
    %360 = vmatprep.subr.mxu0 0.0
    %361 = vmatpush2.msra.mxu0 0.0
    %362 = vmatprep.subr.mxu0 0.0
    %363 = vmatpush2.msra.mxu0 0.0
    %364 = vmatprep.subr.mxu0 0.0
    %365 = vmatpush2.msra.mxu0 0.0
    %366 = vmatprep.subr.mxu0 0.0
    %367 = vmatpush2.msra.mxu0 0.0
    %368 = vmatprep.subr.mxu0 0.0
    %369 = vmatpush2.msra.mxu0 0.0
    %370 = vmatprep.subr.mxu0 0.0
    %371 = vmatpush2.msra.mxu0 0.0
    %372 = vmatprep.subr.mxu0 0.0
    %373 = vmatpush2.msra.mxu0 0.0
    %374 = vmatprep.subr.mxu0 0.0
    %375 = vmatpush2.msra.mxu0 0.0
    %376 = vmatprep.subr.mxu0 0.0
    %377 = vmatpush2.msra.mxu0 0.0
    %378 = vmatprep.subr.mxu0 0.0
    %379 = vmatpush2.msra.mxu0 0.0
    %380 = vmatprep.subr.mxu0 0.0
    %381 = vmatpush2.msra.mxu0 0.0
    %382 = vmatprep.subr.mxu0 0.0
    %383 = vmatpush2.msra.mxu0 0.0
    %384 = vmatprep.subr.mxu0 0.0
    %385 = vmatpush2.msra.mxu0 0.0
    %386 = vmatprep.subr.mxu0 0.0
    %387 = vmatpush2.msra.mxu0 0.0
    %388 = vmatprep.subr.mxu0 0.0
    %389 = vmatpush2.msra.mxu0 0.0
    %390 = vmatprep.mubr.f32.mxu0 0.0
    %391 = vmatmul.mubr.f32.gmra.mxu0 %v312
    %v392 = vpop.f32.mrf.mxu0
    %v393 = vadd.f32 %v295, %v392
    %v394 = vpop.f32.mrf.mxu0
    %v395 = vadd.f32 %v297, %v394
    %396 = vmatprep.mubr.f32.mxu0 0.0
    %397 = vmatmul.mubr.f32.gmra.mxu0 %v315
    %v398 = vpop.f32.mrf.mxu0
    %v399 = vadd.f32 %v301, %v398
    %v400 = vpop.f32.mrf.mxu0
    %v401 = vadd.f32 %v303, %v400
    %402 = vmatprep.mubr.f32.mxu0 0.0
    %403 = vmatmul.mubr.f32.gmra.mxu0 %v318
    %v404 = vpop.f32.mrf.mxu0
    %v405 = vadd.f32 %v307, %v404
    %v406 = vpop.f32.mrf.mxu0
    %v407 = vadd.f32 %v309, %v406
    %408 = vdwg.mxu0
    %409 = vrot.lane.b32.xlu0 %v144, 1
    %v410 = vpop.permute.xlu0 %409
    %411 = vrot.lane.b32.xlu0 %v146, 1
    %v412 = vpop.permute.xlu0 %411
    %413 = vrot.lane.b32.xlu0 %v148, 1
    %v414 = vpop.permute.xlu0 %413
    %415 = vrot.lane.b32.xlu0 %v150, 1
    %v416 = vpop.permute.xlu0 %415
    %417 = vrot.lane.b32.xlu0 %v145, 1
    %v418 = vpop.permute.xlu0 %417
    %419 = vrot.lane.b32.xlu0 %v147, 1
    %v420 = vpop.permute.xlu0 %419
    %421 = vrot.lane.b32.xlu0 %v149, 1
    %v422 = vpop.permute.xlu0 %421
    %423 = vrot.lane.b32.xlu0 %v151, 1
    %v424 = vpop.permute.xlu0 %423
    %vm425 = vcmp.lt.s32.totalorder %v169, 1
    %v426 = vsel %vm425, %v410, %v418
    %v427 = vsel %vm425, %v412, %v420
    %v428 = vsel %vm425, %v414, %v422
    %v429 = vsel %vm425, %v416, %v424
    %v430 = vsel %vm425, %v418, %v410
    %v431 = vsel %vm425, %v420, %v412
    %v432 = vsel %vm425, %v422, %v414
    %v433 = vsel %vm425, %v424, %v416
    %s434 = scalar_lea.vmem [#allocation3], 48
    %v435 = vld [vmem:[%s434] sm:$0xff]
    %v436 = vld [vmem:[%s434 + $0x8] sm:$0xff]
    %v437 = vld [vmem:[%s434 + $0x10] sm:$0xff]
    %v439 = vsel %vm211, %v435, 0
    %v442 = vsel %vm211, %v436, 0
    %v445 = vsel %vm211, %v437, 0
    %v448 = vsel %vm221, %v433, 0
    %v451 = vsel %vm221, %v429, 0
    %453 = vmatprep.subr.mxu0 0.0
    %454 = vmatpush1.msra.mxu0 0.0
    %455 = vmatprep.subr.mxu0 0.0
    %456 = vmatpush1.msra.mxu0 0.0
    %457 = vmatprep.subr.mxu0 0.0
    %458 = vmatpush1.msra.mxu0 0.0
    %459 = vmatprep.subr.mxu0 0.0
    %460 = vmatpush1.msra.mxu0 0.0
    %461 = vmatprep.subr.mxu0 0.0
    %462 = vmatpush1.msra.mxu0 0.0
    %463 = vmatprep.subr.mxu0 0.0
    %464 = vmatpush1.msra.mxu0 0.0
    %465 = vmatprep.subr.mxu0 0.0
    %466 = vmatpush1.msra.mxu0 0.0
    %467 = vmatprep.subr.mxu0 0.0
    %468 = vmatpush1.msra.mxu0 0.0
    %469 = vmatprep.subr.mxu0 0.0
    %470 = vmatpush1.msra.mxu0 0.0
    %471 = vmatprep.subr.mxu0 0.0
    %472 = vmatpush1.msra.mxu0 0.0
    %473 = vmatprep.subr.mxu0 0.0
    %474 = vmatpush1.msra.mxu0 0.0
    %475 = vmatprep.subr.mxu0 0.0
    %476 = vmatpush1.msra.mxu0 0.0
    %477 = vmatprep.subr.mxu0 %v451
    %478 = vmatpush1.msra.mxu0 %v448
    %479 = vmatprep.subr.mxu0 %v428
    %480 = vmatpush1.msra.mxu0 %v432
    %481 = vmatprep.subr.mxu0 %v427
    %482 = vmatpush1.msra.mxu0 %v431
    %483 = vmatprep.subr.mxu0 %v426
    %484 = vmatpush1.msra.mxu0 %v430
    %485 = vmatprep.subr.mxu0 0.0
    %486 = vmatpush2.msra.mxu0 0.0
    %487 = vmatprep.subr.mxu0 0.0
    %488 = vmatpush2.msra.mxu0 0.0
    %489 = vmatprep.subr.mxu0 0.0
    %490 = vmatpush2.msra.mxu0 0.0
    %491 = vmatprep.subr.mxu0 0.0
    %492 = vmatpush2.msra.mxu0 0.0
    %493 = vmatprep.subr.mxu0 0.0
    %494 = vmatpush2.msra.mxu0 0.0
    %495 = vmatprep.subr.mxu0 0.0
    %496 = vmatpush2.msra.mxu0 0.0
    %497 = vmatprep.subr.mxu0 0.0
    %498 = vmatpush2.msra.mxu0 0.0
    %499 = vmatprep.subr.mxu0 0.0
    %500 = vmatpush2.msra.mxu0 0.0
    %501 = vmatprep.subr.mxu0 0.0
    %502 = vmatpush2.msra.mxu0 0.0
    %503 = vmatprep.subr.mxu0 0.0
    %504 = vmatpush2.msra.mxu0 0.0
    %505 = vmatprep.subr.mxu0 0.0
    %506 = vmatpush2.msra.mxu0 0.0
    %507 = vmatprep.subr.mxu0 0.0
    %508 = vmatpush2.msra.mxu0 0.0
    %509 = vmatprep.subr.mxu0 0.0
    %510 = vmatpush2.msra.mxu0 0.0
    %511 = vmatprep.subr.mxu0 0.0
    %512 = vmatpush2.msra.mxu0 0.0
    %513 = vmatprep.subr.mxu0 0.0
    %514 = vmatpush2.msra.mxu0 0.0
    %515 = vmatprep.subr.mxu0 0.0
    %516 = vmatpush2.msra.mxu0 0.0
    %517 = vmatprep.mubr.f32.mxu0 0.0
    %518 = vmatmul.mubr.f32.gmra.mxu0 %v439
    %v519 = vpop.f32.mrf.mxu0
    %v520 = vadd.f32 0.0, %v519
    %v521 = vpop.f32.mrf.mxu0
    %v522 = vadd.f32 0.0, %v521
    %523 = vmatprep.mubr.f32.mxu0 0.0
    %524 = vmatmul.mubr.f32.gmra.mxu0 %v442
    %v525 = vpop.f32.mrf.mxu0
    %v526 = vadd.f32 0.0, %v525
    %v527 = vpop.f32.mrf.mxu0
    %v528 = vadd.f32 0.0, %v527
    %529 = vmatprep.mubr.f32.mxu0 0.0
    %530 = vmatmul.mubr.f32.gmra.mxu0 %v445
    %v531 = vpop.f32.mrf.mxu0
    %v532 = vadd.f32 0.0, %v531
    %v533 = vpop.f32.mrf.mxu0
    %v534 = vadd.f32 0.0, %v533
    %535 = vdwg.mxu0
    %v536 = vadd.f32 %v393, %v520
    %v537 = vadd.f32 %v395, %v522
    %v538 = vadd.f32 %v399, %v526
    %v539 = vadd.f32 %v401, %v528
    %v540 = vadd.f32 %v405, %v532
    %v541 = vadd.f32 %v407, %v534
    %s542 = scalar_lea.vmem [#allocation3], 72
    %v543 = vld [vmem:[%s542] sm:$0xff]
    %v544 = vld [vmem:[%s542 + $0x8] sm:$0xff]
    %v545 = vld [vmem:[%s542 + $0x10] sm:$0xff]
    %v547 = vsel %vm211, %v543, 0
    %v550 = vsel %vm211, %v544, 0
    %v553 = vsel %vm211, %v545, 0
    %v556 = vsel %vm221, %v150, 0
    %v559 = vsel %vm221, %v151, 0
    %561 = vmatprep.subr.mxu0 0.0
    %562 = vmatpush1.msra.mxu0 0.0
    %563 = vmatprep.subr.mxu0 0.0
    %564 = vmatpush1.msra.mxu0 0.0
    %565 = vmatprep.subr.mxu0 0.0
    %566 = vmatpush1.msra.mxu0 0.0
    %567 = vmatprep.subr.mxu0 0.0
    %568 = vmatpush1.msra.mxu0 0.0
    %569 = vmatprep.subr.mxu0 0.0
    %570 = vmatpush1.msra.mxu0 0.0
    %571 = vmatprep.subr.mxu0 0.0
    %572 = vmatpush1.msra.mxu0 0.0
    %573 = vmatprep.subr.mxu0 0.0
    %574 = vmatpush1.msra.mxu0 0.0
    %575 = vmatprep.subr.mxu0 0.0
    %576 = vmatpush1.msra.mxu0 0.0
    %577 = vmatprep.subr.mxu0 0.0
    %578 = vmatpush1.msra.mxu0 0.0
    %579 = vmatprep.subr.mxu0 0.0
    %580 = vmatpush1.msra.mxu0 0.0
    %581 = vmatprep.subr.mxu0 0.0
    %582 = vmatpush1.msra.mxu0 0.0
    %583 = vmatprep.subr.mxu0 0.0
    %584 = vmatpush1.msra.mxu0 0.0
    %585 = vmatprep.subr.mxu0 %v559
    %586 = vmatpush1.msra.mxu0 %v556
    %587 = vmatprep.subr.mxu0 %v149
    %588 = vmatpush1.msra.mxu0 %v148
    %589 = vmatprep.subr.mxu0 %v147
    %590 = vmatpush1.msra.mxu0 %v146
    %591 = vmatprep.subr.mxu0 %v145
    %592 = vmatpush1.msra.mxu0 %v144
    %593 = vmatprep.subr.mxu0 0.0
    %594 = vmatpush2.msra.mxu0 0.0
    %595 = vmatprep.subr.mxu0 0.0
    %596 = vmatpush2.msra.mxu0 0.0
    %597 = vmatprep.subr.mxu0 0.0
    %598 = vmatpush2.msra.mxu0 0.0
    %599 = vmatprep.subr.mxu0 0.0
    %600 = vmatpush2.msra.mxu0 0.0
    %601 = vmatprep.subr.mxu0 0.0
    %602 = vmatpush2.msra.mxu0 0.0
    %603 = vmatprep.subr.mxu0 0.0
    %604 = vmatpush2.msra.mxu0 0.0
    %605 = vmatprep.subr.mxu0 0.0
    %606 = vmatpush2.msra.mxu0 0.0
    %607 = vmatprep.subr.mxu0 0.0
    %608 = vmatpush2.msra.mxu0 0.0
    %609 = vmatprep.subr.mxu0 0.0
    %610 = vmatpush2.msra.mxu0 0.0
    %611 = vmatprep.subr.mxu0 0.0
    %612 = vmatpush2.msra.mxu0 0.0
    %613 = vmatprep.subr.mxu0 0.0
    %614 = vmatpush2.msra.mxu0 0.0
    %615 = vmatprep.subr.mxu0 0.0
    %616 = vmatpush2.msra.mxu0 0.0
    %617 = vmatprep.subr.mxu0 0.0
    %618 = vmatpush2.msra.mxu0 0.0
    %619 = vmatprep.subr.mxu0 0.0
    %620 = vmatpush2.msra.mxu0 0.0
    %621 = vmatprep.subr.mxu0 0.0
    %622 = vmatpush2.msra.mxu0 0.0
    %623 = vmatprep.subr.mxu0 0.0
    %624 = vmatpush2.msra.mxu0 0.0
    %625 = vmatprep.mubr.f32.mxu0 0.0
    %626 = vmatmul.mubr.f32.gmra.mxu0 %v547
    %v627 = vpop.f32.mrf.mxu0
    %v628 = vadd.f32 0.0, %v627
    %v629 = vpop.f32.mrf.mxu0
    %v630 = vadd.f32 0.0, %v629
    %631 = vmatprep.mubr.f32.mxu0 0.0
    %632 = vmatmul.mubr.f32.gmra.mxu0 %v550
    %v633 = vpop.f32.mrf.mxu0
    %v634 = vadd.f32 0.0, %v633
    %v635 = vpop.f32.mrf.mxu0
    %v636 = vadd.f32 0.0, %v635
    %637 = vmatprep.mubr.f32.mxu0 0.0
    %638 = vmatmul.mubr.f32.gmra.mxu0 %v553
    %v639 = vpop.f32.mrf.mxu0
    %v640 = vadd.f32 0.0, %v639
    %v641 = vpop.f32.mrf.mxu0
    %v642 = vadd.f32 0.0, %v641
    %643 = vdwg.mxu0
    %v644 = vadd.f32 %v536, %v628
    %v645 = vadd.f32 %v537, %v630
    %v646 = vadd.f32 %v538, %v634
    %v647 = vadd.f32 %v539, %v636
    %v648 = vadd.f32 %v540, %v640
    %v649 = vadd.f32 %v541, %v642
    %650 = vrot.lane.b32.xlu0 %v144, 127
    %v651 = vpop.permute.xlu0 %650
    %652 = vrot.lane.b32.xlu0 %v146, 127
    %v653 = vpop.permute.xlu0 %652
    %654 = vrot.lane.b32.xlu0 %v148, 127
    %v655 = vpop.permute.xlu0 %654
    %656 = vrot.lane.b32.xlu0 %v150, 127
    %v657 = vpop.permute.xlu0 %656
    %658 = vrot.lane.b32.xlu0 %v145, 127
    %v659 = vpop.permute.xlu0 %658
    %660 = vrot.lane.b32.xlu0 %v147, 127
    %v661 = vpop.permute.xlu0 %660
    %662 = vrot.lane.b32.xlu0 %v149, 127
    %v663 = vpop.permute.xlu0 %662
    %664 = vrot.lane.b32.xlu0 %v151, 127
    %v665 = vpop.permute.xlu0 %664
    %vm666 = vcmp.lt.s32.totalorder %v169, 127
    %v667 = vsel %vm666, %v651, %v659
    %v668 = vsel %vm666, %v653, %v661
    %v669 = vsel %vm666, %v655, %v663
    %v670 = vsel %vm666, %v657, %v665
    %v671 = vsel %vm666, %v659, %v651
    %v672 = vsel %vm666, %v661, %v653
    %v673 = vsel %vm666, %v663, %v655
    %v674 = vsel %vm666, %v665, %v657
    %s675 = scalar_lea.vmem [#allocation3], 96
    %v676 = vld [vmem:[%s675] sm:$0xff]
    %v677 = vld [vmem:[%s675 + $0x8] sm:$0xff]
    %v678 = vld [vmem:[%s675 + $0x10] sm:$0xff]
    %v680 = vsel %vm211, %v676, 0
    %v683 = vsel %vm211, %v677, 0
    %v686 = vsel %vm211, %v678, 0
    %v689 = vsel %vm221, %v670, 0
    %v692 = vsel %vm221, %v674, 0
    %694 = vmatprep.subr.mxu0 0.0
    %695 = vmatpush1.msra.mxu0 0.0
    %696 = vmatprep.subr.mxu0 0.0
    %697 = vmatpush1.msra.mxu0 0.0
    %698 = vmatprep.subr.mxu0 0.0
    %699 = vmatpush1.msra.mxu0 0.0
    %700 = vmatprep.subr.mxu0 0.0
    %701 = vmatpush1.msra.mxu0 0.0
    %702 = vmatprep.subr.mxu0 0.0
    %703 = vmatpush1.msra.mxu0 0.0
    %704 = vmatprep.subr.mxu0 0.0
    %705 = vmatpush1.msra.mxu0 0.0
    %706 = vmatprep.subr.mxu0 0.0
    %707 = vmatpush1.msra.mxu0 0.0
    %708 = vmatprep.subr.mxu0 0.0
    %709 = vmatpush1.msra.mxu0 0.0
    %710 = vmatprep.subr.mxu0 0.0
    %711 = vmatpush1.msra.mxu0 0.0
    %712 = vmatprep.subr.mxu0 0.0
    %713 = vmatpush1.msra.mxu0 0.0
    %714 = vmatprep.subr.mxu0 0.0
    %715 = vmatpush1.msra.mxu0 0.0
    %716 = vmatprep.subr.mxu0 0.0
    %717 = vmatpush1.msra.mxu0 0.0
    %718 = vmatprep.subr.mxu0 %v692
    %719 = vmatpush1.msra.mxu0 %v689
    %720 = vmatprep.subr.mxu0 %v673
    %721 = vmatpush1.msra.mxu0 %v669
    %722 = vmatprep.subr.mxu0 %v672
    %723 = vmatpush1.msra.mxu0 %v668
    %724 = vmatprep.subr.mxu0 %v671
    %725 = vmatpush1.msra.mxu0 %v667
    %726 = vmatprep.subr.mxu0 0.0
    %727 = vmatpush2.msra.mxu0 0.0
    %728 = vmatprep.subr.mxu0 0.0
    %729 = vmatpush2.msra.mxu0 0.0
    %730 = vmatprep.subr.mxu0 0.0
    %731 = vmatpush2.msra.mxu0 0.0
    %732 = vmatprep.subr.mxu0 0.0
    %733 = vmatpush2.msra.mxu0 0.0
    %734 = vmatprep.subr.mxu0 0.0
    %735 = vmatpush2.msra.mxu0 0.0
    %736 = vmatprep.subr.mxu0 0.0
    %737 = vmatpush2.msra.mxu0 0.0
    %738 = vmatprep.subr.mxu0 0.0
    %739 = vmatpush2.msra.mxu0 0.0
    %740 = vmatprep.subr.mxu0 0.0
    %741 = vmatpush2.msra.mxu0 0.0
    %742 = vmatprep.subr.mxu0 0.0
    %743 = vmatpush2.msra.mxu0 0.0
    %744 = vmatprep.subr.mxu0 0.0
    %745 = vmatpush2.msra.mxu0 0.0
    %746 = vmatprep.subr.mxu0 0.0
    %747 = vmatpush2.msra.mxu0 0.0
    %748 = vmatprep.subr.mxu0 0.0
    %749 = vmatpush2.msra.mxu0 0.0
    %750 = vmatprep.subr.mxu0 0.0
    %751 = vmatpush2.msra.mxu0 0.0
    %752 = vmatprep.subr.mxu0 0.0
    %753 = vmatpush2.msra.mxu0 0.0
    %754 = vmatprep.subr.mxu0 0.0
    %755 = vmatpush2.msra.mxu0 0.0
    %756 = vmatprep.subr.mxu0 0.0
    %757 = vmatpush2.msra.mxu0 0.0
    %758 = vmatprep.mubr.f32.mxu0 0.0
    %759 = vmatmul.mubr.f32.gmra.mxu0 %v680
    %v760 = vpop.f32.mrf.mxu0
    %v761 = vadd.f32 0.0, %v760
    %v762 = vpop.f32.mrf.mxu0
    %v763 = vadd.f32 0.0, %v762
    %764 = vmatprep.mubr.f32.mxu0 0.0
    %765 = vmatmul.mubr.f32.gmra.mxu0 %v683
    %v766 = vpop.f32.mrf.mxu0
    %v767 = vadd.f32 0.0, %v766
    %v768 = vpop.f32.mrf.mxu0
    %v769 = vadd.f32 0.0, %v768
    %770 = vmatprep.mubr.f32.mxu0 0.0
    %771 = vmatmul.mubr.f32.gmra.mxu0 %v686
    %v772 = vpop.f32.mrf.mxu0
    %v773 = vadd.f32 0.0, %v772
    %v774 = vpop.f32.mrf.mxu0
    %v775 = vadd.f32 0.0, %v774
    %776 = vdwg.mxu0
    %v777 = vadd.f32 %v644, %v761
    %v778 = vadd.f32 %v645, %v763
    %v779 = vadd.f32 %v646, %v767
    %v780 = vadd.f32 %v647, %v769
    %v781 = vadd.f32 %v648, %v773
    %v782 = vadd.f32 %v649, %v775
    %783 = vrot.lane.b32.xlu0 %v144, 126
    %v784 = vpop.permute.xlu0 %783
    %785 = vrot.lane.b32.xlu0 %v146, 126
    %v786 = vpop.permute.xlu0 %785
    %787 = vrot.lane.b32.xlu0 %v148, 126
    %v788 = vpop.permute.xlu0 %787
    %789 = vrot.lane.b32.xlu0 %v150, 126
    %v790 = vpop.permute.xlu0 %789
    %791 = vrot.lane.b32.xlu0 %v145, 126
    %v792 = vpop.permute.xlu0 %791
    %793 = vrot.lane.b32.xlu0 %v147, 126
    %v794 = vpop.permute.xlu0 %793
    %795 = vrot.lane.b32.xlu0 %v149, 126
    %v796 = vpop.permute.xlu0 %795
    %797 = vrot.lane.b32.xlu0 %v151, 126
    %v798 = vpop.permute.xlu0 %797
    %vm799 = vcmp.lt.s32.totalorder %v169, 126
    %v800 = vsel %vm799, %v784, %v792
    %v801 = vsel %vm799, %v786, %v794
    %v802 = vsel %vm799, %v788, %v796
    %v803 = vsel %vm799, %v790, %v798
    %v804 = vsel %vm799, %v792, %v784
    %v805 = vsel %vm799, %v794, %v786
    %v806 = vsel %vm799, %v796, %v788
    %v807 = vsel %vm799, %v798, %v790
    %s808 = scalar_lea.vmem [#allocation3], 120
    %v809 = vld [vmem:[%s808] sm:$0xff]
    %v810 = vld [vmem:[%s808 + $0x8] sm:$0xff]
    %v811 = vld [vmem:[%s808 + $0x10] sm:$0xff]
    %v813 = vsel %vm211, %v809, 0
    %v816 = vsel %vm211, %v810, 0
    %v819 = vsel %vm211, %v811, 0
    %v822 = vsel %vm221, %v803, 0
    %v825 = vsel %vm221, %v807, 0
    %827 = vmatprep.subr.mxu0 0.0
    %828 = vmatpush1.msra.mxu0 0.0
    %829 = vmatprep.subr.mxu0 0.0
    %830 = vmatpush1.msra.mxu0 0.0
    %831 = vmatprep.subr.mxu0 0.0
    %832 = vmatpush1.msra.mxu0 0.0
    %833 = vmatprep.subr.mxu0 0.0
    %834 = vmatpush1.msra.mxu0 0.0
    %835 = vmatprep.subr.mxu0 0.0
    %836 = vmatpush1.msra.mxu0 0.0
    %837 = vmatprep.subr.mxu0 0.0
    %838 = vmatpush1.msra.mxu0 0.0
    %839 = vmatprep.subr.mxu0 0.0
    %840 = vmatpush1.msra.mxu0 0.0
    %841 = vmatprep.subr.mxu0 0.0
    %842 = vmatpush1.msra.mxu0 0.0
    %843 = vmatprep.subr.mxu0 0.0
    %844 = vmatpush1.msra.mxu0 0.0
    %845 = vmatprep.subr.mxu0 0.0
    %846 = vmatpush1.msra.mxu0 0.0
    %847 = vmatprep.subr.mxu0 0.0
    %848 = vmatpush1.msra.mxu0 0.0
    %849 = vmatprep.subr.mxu0 0.0
    %850 = vmatpush1.msra.mxu0 0.0
    %851 = vmatprep.subr.mxu0 %v825
    %852 = vmatpush1.msra.mxu0 %v822
    %853 = vmatprep.subr.mxu0 %v806
    %854 = vmatpush1.msra.mxu0 %v802
    %855 = vmatprep.subr.mxu0 %v805
    %856 = vmatpush1.msra.mxu0 %v801
    %857 = vmatprep.subr.mxu0 %v804
    %858 = vmatpush1.msra.mxu0 %v800
    %859 = vmatprep.subr.mxu0 0.0
    %860 = vmatpush2.msra.mxu0 0.0
    %861 = vmatprep.subr.mxu0 0.0
    %862 = vmatpush2.msra.mxu0 0.0
    %863 = vmatprep.subr.mxu0 0.0
    %864 = vmatpush2.msra.mxu0 0.0
    %865 = vmatprep.subr.mxu0 0.0
    %866 = vmatpush2.msra.mxu0 0.0
    %867 = vmatprep.subr.mxu0 0.0
    %868 = vmatpush2.msra.mxu0 0.0
    %869 = vmatprep.subr.mxu0 0.0
    %870 = vmatpush2.msra.mxu0 0.0
    %871 = vmatprep.subr.mxu0 0.0
    %872 = vmatpush2.msra.mxu0 0.0
    %873 = vmatprep.subr.mxu0 0.0
    %874 = vmatpush2.msra.mxu0 0.0
    %875 = vmatprep.subr.mxu0 0.0
    %876 = vmatpush2.msra.mxu0 0.0
    %877 = vmatprep.subr.mxu0 0.0
    %878 = vmatpush2.msra.mxu0 0.0
    %879 = vmatprep.subr.mxu0 0.0
    %880 = vmatpush2.msra.mxu0 0.0
    %881 = vmatprep.subr.mxu0 0.0
    %882 = vmatpush2.msra.mxu0 0.0
    %883 = vmatprep.subr.mxu0 0.0
    %884 = vmatpush2.msra.mxu0 0.0
    %885 = vmatprep.subr.mxu0 0.0
    %886 = vmatpush2.msra.mxu0 0.0
    %887 = vmatprep.subr.mxu0 0.0
    %888 = vmatpush2.msra.mxu0 0.0
    %889 = vmatprep.subr.mxu0 0.0
    %890 = vmatpush2.msra.mxu0 0.0
    %891 = vmatprep.mubr.f32.mxu0 0.0
    %892 = vmatmul.mubr.f32.gmra.mxu0 %v813
    %v893 = vpop.f32.mrf.mxu0
    %v894 = vadd.f32 0.0, %v893
    %v895 = vpop.f32.mrf.mxu0
    %v896 = vadd.f32 0.0, %v895
    %897 = vmatprep.mubr.f32.mxu0 0.0
    %898 = vmatmul.mubr.f32.gmra.mxu0 %v816
    %v899 = vpop.f32.mrf.mxu0
    %v900 = vadd.f32 0.0, %v899
    %v901 = vpop.f32.mrf.mxu0
    %v902 = vadd.f32 0.0, %v901
    %903 = vmatprep.mubr.f32.mxu0 0.0
    %904 = vmatmul.mubr.f32.gmra.mxu0 %v819
    %v905 = vpop.f32.mrf.mxu0
    %v906 = vadd.f32 0.0, %v905
    %v907 = vpop.f32.mrf.mxu0
    %v908 = vadd.f32 0.0, %v907
    %909 = vdwg.mxu0
    %v910 = vadd.f32 %v777, %v894
    %v911 = vadd.f32 %v778, %v896
    %v912 = vadd.f32 %v779, %v900
    %v913 = vadd.f32 %v780, %v902
    %v914 = vadd.f32 %v781, %v906
    %v915 = vadd.f32 %v782, %v908
    %916 = vrot.lane.b32.xlu0 %v144, 125
    %v917 = vpop.permute.xlu0 %916
    %918 = vrot.lane.b32.xlu0 %v146, 125
    %v919 = vpop.permute.xlu0 %918
    %920 = vrot.lane.b32.xlu0 %v148, 125
    %v921 = vpop.permute.xlu0 %920
    %922 = vrot.lane.b32.xlu0 %v150, 125
    %v923 = vpop.permute.xlu0 %922
    %924 = vrot.lane.b32.xlu0 %v145, 125
    %v925 = vpop.permute.xlu0 %924
    %926 = vrot.lane.b32.xlu0 %v147, 125
    %v927 = vpop.permute.xlu0 %926
    %928 = vrot.lane.b32.xlu0 %v149, 125
    %v929 = vpop.permute.xlu0 %928
    %930 = vrot.lane.b32.xlu0 %v151, 125
    %v931 = vpop.permute.xlu0 %930
    %vm932 = vcmp.lt.s32.totalorder %v169, 125
    %v933 = vsel %vm932, %v917, %v925
    %v934 = vsel %vm932, %v919, %v927
    %v935 = vsel %vm932, %v921, %v929
    %v936 = vsel %vm932, %v923, %v931
    %v937 = vsel %vm932, %v925, %v917
    %v938 = vsel %vm932, %v927, %v919
    %v939 = vsel %vm932, %v929, %v921
    %v940 = vsel %vm932, %v931, %v923
    %s941 = scalar_lea.vmem [#allocation3], 144
    %v942 = vld [vmem:[%s941] sm:$0xff]
    %v943 = vld [vmem:[%s941 + $0x8] sm:$0xff]
    %v944 = vld [vmem:[%s941 + $0x10] sm:$0xff]
    %v946 = vsel %vm211, %v942, 0
    %v949 = vsel %vm211, %v943, 0
    %v952 = vsel %vm211, %v944, 0
    %v955 = vsel %vm221, %v936, 0
    %v958 = vsel %vm221, %v940, 0
    %960 = vmatprep.subr.mxu0 0.0
    %961 = vmatpush1.msra.mxu0 0.0
    %962 = vmatprep.subr.mxu0 0.0
    %963 = vmatpush1.msra.mxu0 0.0
    %964 = vmatprep.subr.mxu0 0.0
    %965 = vmatpush1.msra.mxu0 0.0
    %966 = vmatprep.subr.mxu0 0.0
    %967 = vmatpush1.msra.mxu0 0.0
    %968 = vmatprep.subr.mxu0 0.0
    %969 = vmatpush1.msra.mxu0 0.0
    %970 = vmatprep.subr.mxu0 0.0
    %971 = vmatpush1.msra.mxu0 0.0
    %972 = vmatprep.subr.mxu0 0.0
    %973 = vmatpush1.msra.mxu0 0.0
    %974 = vmatprep.subr.mxu0 0.0
    %975 = vmatpush1.msra.mxu0 0.0
    %976 = vmatprep.subr.mxu0 0.0
    %977 = vmatpush1.msra.mxu0 0.0
    %978 = vmatprep.subr.mxu0 0.0
    %979 = vmatpush1.msra.mxu0 0.0
    %980 = vmatprep.subr.mxu0 0.0
    %981 = vmatpush1.msra.mxu0 0.0
    %982 = vmatprep.subr.mxu0 0.0
    %983 = vmatpush1.msra.mxu0 0.0
    %984 = vmatprep.subr.mxu0 %v958
    %985 = vmatpush1.msra.mxu0 %v955
    %986 = vmatprep.subr.mxu0 %v939
    %987 = vmatpush1.msra.mxu0 %v935
    %988 = vmatprep.subr.mxu0 %v938
    %989 = vmatpush1.msra.mxu0 %v934
    %990 = vmatprep.subr.mxu0 %v937
    %991 = vmatpush1.msra.mxu0 %v933
    %992 = vmatprep.subr.mxu0 0.0
    %993 = vmatpush2.msra.mxu0 0.0
    %994 = vmatprep.subr.mxu0 0.0
    %995 = vmatpush2.msra.mxu0 0.0
    %996 = vmatprep.subr.mxu0 0.0
    %997 = vmatpush2.msra.mxu0 0.0
    %998 = vmatprep.subr.mxu0 0.0
    %999 = vmatpush2.msra.mxu0 0.0
    %1000 = vmatprep.subr.mxu0 0.0
    %1001 = vmatpush2.msra.mxu0 0.0
    %1002 = vmatprep.subr.mxu0 0.0
    %1003 = vmatpush2.msra.mxu0 0.0
    %1004 = vmatprep.subr.mxu0 0.0
    %1005 = vmatpush2.msra.mxu0 0.0
    %1006 = vmatprep.subr.mxu0 0.0
    %1007 = vmatpush2.msra.mxu0 0.0
    %1008 = vmatprep.subr.mxu0 0.0
    %1009 = vmatpush2.msra.mxu0 0.0
    %1010 = vmatprep.subr.mxu0 0.0
    %1011 = vmatpush2.msra.mxu0 0.0
    %1012 = vmatprep.subr.mxu0 0.0
    %1013 = vmatpush2.msra.mxu0 0.0
    %1014 = vmatprep.subr.mxu0 0.0
    %1015 = vmatpush2.msra.mxu0 0.0
    %1016 = vmatprep.subr.mxu0 0.0
    %1017 = vmatpush2.msra.mxu0 0.0
    %1018 = vmatprep.subr.mxu0 0.0
    %1019 = vmatpush2.msra.mxu0 0.0
    %1020 = vmatprep.subr.mxu0 0.0
    %1021 = vmatpush2.msra.mxu0 0.0
    %1022 = vmatprep.subr.mxu0 0.0
    %1023 = vmatpush2.msra.mxu0 0.0
    %1024 = vmatprep.mubr.f32.mxu0 0.0
    %1025 = vmatmul.mubr.f32.gmra.mxu0 %v946
    %v1026 = vpop.f32.mrf.mxu0
    %v1027 = vadd.f32 0.0, %v1026
    %v1028 = vpop.f32.mrf.mxu0
    %v1029 = vadd.f32 0.0, %v1028
    %1030 = vmatprep.mubr.f32.mxu0 0.0
    %1031 = vmatmul.mubr.f32.gmra.mxu0 %v949
    %v1032 = vpop.f32.mrf.mxu0
    %v1033 = vadd.f32 0.0, %v1032
    %v1034 = vpop.f32.mrf.mxu0
    %v1035 = vadd.f32 0.0, %v1034
    %1036 = vmatprep.mubr.f32.mxu0 0.0
    %1037 = vmatmul.mubr.f32.gmra.mxu0 %v952
    %v1038 = vpop.f32.mrf.mxu0
    %v1039 = vadd.f32 0.0, %v1038
    %v1040 = vpop.f32.mrf.mxu0
    %v1041 = vadd.f32 0.0, %v1040
    %1042 = vdwg.mxu0
    %v1043 = vadd.f32 %v910, %v1027
    %v1044 = vadd.f32 %v911, %v1029
    %v1045 = vadd.f32 %v912, %v1033
    %v1046 = vadd.f32 %v913, %v1035
    %v1047 = vadd.f32 %v914, %v1039
    %v1048 = vadd.f32 %v915, %v1041
    %v1050 = vlaneseq
    %v1051 = vshrl.u32 %v1050, 7
    %v1052 = vsub.s32 0, %v1051
    %v1053 = vrot.slane %v35, %v1052
    %v1054 = vlaneseq
    %v1055 = vshrl.u32 %v1054, 7
    %v1056 = vsub.s32 1, %v1055
    %v1057 = vrot.slane %v35, %v1056
    %v1060 = vmul.f32 %v1043, %v1053
    %v1061 = vmul.f32 %v1044, %v1057
    %v1062 = vmul.f32 %v1045, %v1053
    %v1063 = vmul.f32 %v1046, %v1057
    %v1064 = vmul.f32 %v1047, %v1053
    %v1065 = vmul.f32 %v1048, %v1057
    %1066 = vst [vmem:[#allocation2] sm:$0xff] %v1060
    %1067 = vst [vmem:[#allocation2 + $0x8] sm:$0xff] %v1061
    %1068 = vst [vmem:[#allocation2 + $0x10] sm:$0xff] %v1062
    %1069 = vst [vmem:[#allocation2 + $0x18] sm:$0xff] %v1063
    %1070 = vst [vmem:[#allocation2 + $0x20] sm:$0xff] %v1064
    %1071 = vst [vmem:[#allocation2 + $0x28] sm:$0xff] %v1065
    %v1072 = vld [vmem:[#allocation2] sm:$0xff]
    %v1073 = vld [vmem:[#allocation2 + $0x8] sm:$0xff]
    %v1074 = vld [vmem:[#allocation2 + $0x10] sm:$0xff]
    %v1075 = vld [vmem:[#allocation2 + $0x18] sm:$0xff]
    %v1076 = vld [vmem:[#allocation2 + $0x20] sm:$0xff]
    %v1077 = vld [vmem:[#allocation2 + $0x28] sm:$0xff]
    %v1078 = vld [vmem:[#allocation2 + $0x30] sm:$0x1]
    %v1079 = vld [vmem:[#allocation2 + $0x38] sm:$0x1]
    %1080 = vrot.lane.b32.xlu0 %v1072, 3
    %v1081 = vpop.permute.xlu0 %1080
    %1082 = vrot.lane.b32.xlu0 %v1074, 3
    %v1083 = vpop.permute.xlu0 %1082
    %1084 = vrot.lane.b32.xlu0 %v1076, 3
    %v1085 = vpop.permute.xlu0 %1084
    %1086 = vrot.lane.b32.xlu0 %v1078, 3
    %v1087 = vpop.permute.xlu0 %1086
    %1088 = vrot.lane.b32.xlu0 %v1073, 3
    %v1089 = vpop.permute.xlu0 %1088
    %1090 = vrot.lane.b32.xlu0 %v1075, 3
    %v1091 = vpop.permute.xlu0 %1090
    %1092 = vrot.lane.b32.xlu0 %v1077, 3
    %v1093 = vpop.permute.xlu0 %1092
    %1094 = vrot.lane.b32.xlu0 %v1079, 3
    %v1095 = vpop.permute.xlu0 %1094
    %v1096 = vsel %vm170, %v1081, %v1089
    %v1097 = vsel %vm170, %v1083, %v1091
    %v1098 = vsel %vm170, %v1085, %v1093
    %v1099 = vsel %vm170, %v1087, %v1095
    %v1100 = vsel %vm170, %v1089, %v1081
    %v1101 = vsel %vm170, %v1091, %v1083
    %v1102 = vsel %vm170, %v1093, %v1085
    %v1103 = vsel %vm170, %v1095, %v1087
    %s1104 = scalar_lea.vmem [#allocation3], 168
    %v1105 = vld [vmem:[%s1104] sm:$0xff]
    %v1106 = vld [vmem:[%s1104 + $0x8] sm:$0xff]
    %v1107 = vld [vmem:[%s1104 + $0x10] sm:$0xff]
    %1108 = vrot.lane.b32.xlu0 %v1072, 2
    %v1109 = vpop.permute.xlu0 %1108
    %1110 = vrot.lane.b32.xlu0 %v1074, 2
    %v1111 = vpop.permute.xlu0 %1110
    %1112 = vrot.lane.b32.xlu0 %v1076, 2
    %v1113 = vpop.permute.xlu0 %1112
    %1114 = vrot.lane.b32.xlu0 %v1078, 2
    %v1115 = vpop.permute.xlu0 %1114
    %1116 = vrot.lane.b32.xlu0 %v1073, 2
    %v1117 = vpop.permute.xlu0 %1116
    %1118 = vrot.lane.b32.xlu0 %v1075, 2
    %v1119 = vpop.permute.xlu0 %1118
    %1120 = vrot.lane.b32.xlu0 %v1077, 2
    %v1121 = vpop.permute.xlu0 %1120
    %1122 = vrot.lane.b32.xlu0 %v1079, 2
    %v1123 = vpop.permute.xlu0 %1122
    %v1124 = vsel %vm198, %v1109, %v1117
    %v1125 = vsel %vm198, %v1111, %v1119
    %v1126 = vsel %vm198, %v1113, %v1121
    %v1127 = vsel %vm198, %v1115, %v1123
    %v1128 = vsel %vm198, %v1117, %v1109
    %v1129 = vsel %vm198, %v1119, %v1111
    %v1130 = vsel %vm198, %v1121, %v1113
    %v1131 = vsel %vm198, %v1123, %v1115
    %s1132 = scalar_lea.vmem [#allocation3], 192
    %v1133 = vld [vmem:[%s1132] sm:$0xff]
    %v1134 = vld [vmem:[%s1132 + $0x8] sm:$0xff]
    %v1135 = vld [vmem:[%s1132 + $0x10] sm:$0xff]
    %v1137 = vsel %vm211, %v1133, 0
    %v1140 = vsel %vm211, %v1134, 0
    %v1143 = vsel %vm211, %v1135, 0
    %v1146 = vsel %vm221, %v1131, 0
    %v1149 = vsel %vm221, %v1127, 0
    %1151 = vmatprep.subr.mxu0 0.0
    %1152 = vmatpush1.msra.mxu0 0.0
    %1153 = vmatprep.subr.mxu0 0.0
    %1154 = vmatpush1.msra.mxu0 0.0
    %1155 = vmatprep.subr.mxu0 0.0
    %1156 = vmatpush1.msra.mxu0 0.0
    %1157 = vmatprep.subr.mxu0 0.0
    %1158 = vmatpush1.msra.mxu0 0.0
    %1159 = vmatprep.subr.mxu0 0.0
    %1160 = vmatpush1.msra.mxu0 0.0
    %1161 = vmatprep.subr.mxu0 0.0
    %1162 = vmatpush1.msra.mxu0 0.0
    %1163 = vmatprep.subr.mxu0 0.0
    %1164 = vmatpush1.msra.mxu0 0.0
    %1165 = vmatprep.subr.mxu0 0.0
    %1166 = vmatpush1.msra.mxu0 0.0
    %1167 = vmatprep.subr.mxu0 0.0
    %1168 = vmatpush1.msra.mxu0 0.0
    %1169 = vmatprep.subr.mxu0 0.0
    %1170 = vmatpush1.msra.mxu0 0.0
    %1171 = vmatprep.subr.mxu0 0.0
    %1172 = vmatpush1.msra.mxu0 0.0
    %1173 = vmatprep.subr.mxu0 0.0
    %1174 = vmatpush1.msra.mxu0 0.0
    %1175 = vmatprep.subr.mxu0 %v1149
    %1176 = vmatpush1.msra.mxu0 %v1146
    %1177 = vmatprep.subr.mxu0 %v1126
    %1178 = vmatpush1.msra.mxu0 %v1130
    %1179 = vmatprep.subr.mxu0 %v1125
    %1180 = vmatpush1.msra.mxu0 %v1129
    %1181 = vmatprep.subr.mxu0 %v1124
    %1182 = vmatpush1.msra.mxu0 %v1128
    %1183 = vmatprep.subr.mxu0 0.0
    %1184 = vmatpush2.msra.mxu0 0.0
    %1185 = vmatprep.subr.mxu0 0.0
    %1186 = vmatpush2.msra.mxu0 0.0
    %1187 = vmatprep.subr.mxu0 0.0
    %1188 = vmatpush2.msra.mxu0 0.0
    %1189 = vmatprep.subr.mxu0 0.0
    %1190 = vmatpush2.msra.mxu0 0.0
    %1191 = vmatprep.subr.mxu0 0.0
    %1192 = vmatpush2.msra.mxu0 0.0
    %1193 = vmatprep.subr.mxu0 0.0
    %1194 = vmatpush2.msra.mxu0 0.0
    %1195 = vmatprep.subr.mxu0 0.0
    %1196 = vmatpush2.msra.mxu0 0.0
    %1197 = vmatprep.subr.mxu0 0.0
    %1198 = vmatpush2.msra.mxu0 0.0
    %1199 = vmatprep.subr.mxu0 0.0
    %1200 = vmatpush2.msra.mxu0 0.0
    %1201 = vmatprep.subr.mxu0 0.0
    %1202 = vmatpush2.msra.mxu0 0.0
    %1203 = vmatprep.subr.mxu0 0.0
    %1204 = vmatpush2.msra.mxu0 0.0
    %1205 = vmatprep.subr.mxu0 0.0
    %1206 = vmatpush2.msra.mxu0 0.0
    %1207 = vmatprep.subr.mxu0 0.0
    %1208 = vmatpush2.msra.mxu0 0.0
    %1209 = vmatprep.subr.mxu0 0.0
    %1210 = vmatpush2.msra.mxu0 0.0
    %1211 = vmatprep.subr.mxu0 0.0
    %1212 = vmatpush2.msra.mxu0 0.0
    %1213 = vmatprep.subr.mxu0 0.0
    %1214 = vmatpush2.msra.mxu0 0.0
    %1215 = vmatprep.mubr.f32.mxu0 0.0
    %1216 = vmatmul.mubr.f32.gmra.mxu0 %v1137
    %v1217 = vpop.f32.mrf.mxu0
    %v1218 = vadd.f32 0.0, %v1217
    %v1219 = vpop.f32.mrf.mxu0
    %v1220 = vadd.f32 0.0, %v1219
    %1221 = vmatprep.mubr.f32.mxu0 0.0
    %1222 = vmatmul.mubr.f32.gmra.mxu0 %v1140
    %v1223 = vpop.f32.mrf.mxu0
    %v1224 = vadd.f32 0.0, %v1223
    %v1225 = vpop.f32.mrf.mxu0
    %v1226 = vadd.f32 0.0, %v1225
    %1227 = vmatprep.mubr.f32.mxu0 0.0
    %1228 = vmatmul.mubr.f32.gmra.mxu0 %v1143
    %v1229 = vpop.f32.mrf.mxu0
    %v1230 = vadd.f32 0.0, %v1229
    %v1231 = vpop.f32.mrf.mxu0
    %v1232 = vadd.f32 0.0, %v1231
    %1233 = vdwg.mxu0
    %v1235 = vsel %vm211, %v1105, 0
    %v1238 = vsel %vm211, %v1106, 0
    %v1241 = vsel %vm211, %v1107, 0
    %v1244 = vsel %vm221, %v1103, 0
    %v1247 = vsel %vm221, %v1099, 0
    %1249 = vmatprep.subr.mxu0 0.0
    %1250 = vmatpush1.msra.mxu0 0.0
    %1251 = vmatprep.subr.mxu0 0.0
    %1252 = vmatpush1.msra.mxu0 0.0
    %1253 = vmatprep.subr.mxu0 0.0
    %1254 = vmatpush1.msra.mxu0 0.0
    %1255 = vmatprep.subr.mxu0 0.0
    %1256 = vmatpush1.msra.mxu0 0.0
    %1257 = vmatprep.subr.mxu0 0.0
    %1258 = vmatpush1.msra.mxu0 0.0
    %1259 = vmatprep.subr.mxu0 0.0
    %1260 = vmatpush1.msra.mxu0 0.0
    %1261 = vmatprep.subr.mxu0 0.0
    %1262 = vmatpush1.msra.mxu0 0.0
    %1263 = vmatprep.subr.mxu0 0.0
    %1264 = vmatpush1.msra.mxu0 0.0
    %1265 = vmatprep.subr.mxu0 0.0
    %1266 = vmatpush1.msra.mxu0 0.0
    %1267 = vmatprep.subr.mxu0 0.0
    %1268 = vmatpush1.msra.mxu0 0.0
    %1269 = vmatprep.subr.mxu0 0.0
    %1270 = vmatpush1.msra.mxu0 0.0
    %1271 = vmatprep.subr.mxu0 0.0
    %1272 = vmatpush1.msra.mxu0 0.0
    %1273 = vmatprep.subr.mxu0 %v1247
    %1274 = vmatpush1.msra.mxu0 %v1244
    %1275 = vmatprep.subr.mxu0 %v1098
    %1276 = vmatpush1.msra.mxu0 %v1102
    %1277 = vmatprep.subr.mxu0 %v1097
    %1278 = vmatpush1.msra.mxu0 %v1101
    %1279 = vmatprep.subr.mxu0 %v1096
    %1280 = vmatpush1.msra.mxu0 %v1100
    %1281 = vmatprep.subr.mxu0 0.0
    %1282 = vmatpush2.msra.mxu0 0.0
    %1283 = vmatprep.subr.mxu0 0.0
    %1284 = vmatpush2.msra.mxu0 0.0
    %1285 = vmatprep.subr.mxu0 0.0
    %1286 = vmatpush2.msra.mxu0 0.0
    %1287 = vmatprep.subr.mxu0 0.0
    %1288 = vmatpush2.msra.mxu0 0.0
    %1289 = vmatprep.subr.mxu0 0.0
    %1290 = vmatpush2.msra.mxu0 0.0
    %1291 = vmatprep.subr.mxu0 0.0
    %1292 = vmatpush2.msra.mxu0 0.0
    %1293 = vmatprep.subr.mxu0 0.0
    %1294 = vmatpush2.msra.mxu0 0.0
    %1295 = vmatprep.subr.mxu0 0.0
    %1296 = vmatpush2.msra.mxu0 0.0
    %1297 = vmatprep.subr.mxu0 0.0
    %1298 = vmatpush2.msra.mxu0 0.0
    %1299 = vmatprep.subr.mxu0 0.0
    %1300 = vmatpush2.msra.mxu0 0.0
    %1301 = vmatprep.subr.mxu0 0.0
    %1302 = vmatpush2.msra.mxu0 0.0
    %1303 = vmatprep.subr.mxu0 0.0
    %1304 = vmatpush2.msra.mxu0 0.0
    %1305 = vmatprep.subr.mxu0 0.0
    %1306 = vmatpush2.msra.mxu0 0.0
    %1307 = vmatprep.subr.mxu0 0.0
    %1308 = vmatpush2.msra.mxu0 0.0
    %1309 = vmatprep.subr.mxu0 0.0
    %1310 = vmatpush2.msra.mxu0 0.0
    %1311 = vmatprep.subr.mxu0 0.0
    %1312 = vmatpush2.msra.mxu0 0.0
    %1313 = vmatprep.mubr.f32.mxu0 0.0
    %1314 = vmatmul.mubr.f32.gmra.mxu0 %v1235
    %v1315 = vpop.f32.mrf.mxu0
    %v1316 = vadd.f32 %v1218, %v1315
    %v1317 = vpop.f32.mrf.mxu0
    %v1318 = vadd.f32 %v1220, %v1317
    %1319 = vmatprep.mubr.f32.mxu0 0.0
    %1320 = vmatmul.mubr.f32.gmra.mxu0 %v1238
    %v1321 = vpop.f32.mrf.mxu0
    %v1322 = vadd.f32 %v1224, %v1321
    %v1323 = vpop.f32.mrf.mxu0
    %v1324 = vadd.f32 %v1226, %v1323
    %1325 = vmatprep.mubr.f32.mxu0 0.0
    %1326 = vmatmul.mubr.f32.gmra.mxu0 %v1241
    %v1327 = vpop.f32.mrf.mxu0
    %v1328 = vadd.f32 %v1230, %v1327
    %v1329 = vpop.f32.mrf.mxu0
    %v1330 = vadd.f32 %v1232, %v1329
    %1331 = vdwg.mxu0
    %1332 = vrot.lane.b32.xlu0 %v1072, 1
    %v1333 = vpop.permute.xlu0 %1332
    %1334 = vrot.lane.b32.xlu0 %v1074, 1
    %v1335 = vpop.permute.xlu0 %1334
    %1336 = vrot.lane.b32.xlu0 %v1076, 1
    %v1337 = vpop.permute.xlu0 %1336
    %1338 = vrot.lane.b32.xlu0 %v1078, 1
    %v1339 = vpop.permute.xlu0 %1338
    %1340 = vrot.lane.b32.xlu0 %v1073, 1
    %v1341 = vpop.permute.xlu0 %1340
    %1342 = vrot.lane.b32.xlu0 %v1075, 1
    %v1343 = vpop.permute.xlu0 %1342
    %1344 = vrot.lane.b32.xlu0 %v1077, 1
    %v1345 = vpop.permute.xlu0 %1344
    %1346 = vrot.lane.b32.xlu0 %v1079, 1
    %v1347 = vpop.permute.xlu0 %1346
    %v1348 = vsel %vm425, %v1333, %v1341
    %v1349 = vsel %vm425, %v1335, %v1343
    %v1350 = vsel %vm425, %v1337, %v1345
    %v1351 = vsel %vm425, %v1339, %v1347
    %v1352 = vsel %vm425, %v1341, %v1333
    %v1353 = vsel %vm425, %v1343, %v1335
    %v1354 = vsel %vm425, %v1345, %v1337
    %v1355 = vsel %vm425, %v1347, %v1339
    %s1356 = scalar_lea.vmem [#allocation3], 216
    %v1357 = vld [vmem:[%s1356] sm:$0xff]
    %v1358 = vld [vmem:[%s1356 + $0x8] sm:$0xff]
    %v1359 = vld [vmem:[%s1356 + $0x10] sm:$0xff]
    %v1361 = vsel %vm211, %v1357, 0
    %v1364 = vsel %vm211, %v1358, 0
    %v1367 = vsel %vm211, %v1359, 0
    %v1370 = vsel %vm221, %v1355, 0
    %v1373 = vsel %vm221, %v1351, 0
    %1375 = vmatprep.subr.mxu0 0.0
    %1376 = vmatpush1.msra.mxu0 0.0
    %1377 = vmatprep.subr.mxu0 0.0
    %1378 = vmatpush1.msra.mxu0 0.0
    %1379 = vmatprep.subr.mxu0 0.0
    %1380 = vmatpush1.msra.mxu0 0.0
    %1381 = vmatprep.subr.mxu0 0.0
    %1382 = vmatpush1.msra.mxu0 0.0
    %1383 = vmatprep.subr.mxu0 0.0
    %1384 = vmatpush1.msra.mxu0 0.0
    %1385 = vmatprep.subr.mxu0 0.0
    %1386 = vmatpush1.msra.mxu0 0.0
    %1387 = vmatprep.subr.mxu0 0.0
    %1388 = vmatpush1.msra.mxu0 0.0
    %1389 = vmatprep.subr.mxu0 0.0
    %1390 = vmatpush1.msra.mxu0 0.0
    %1391 = vmatprep.subr.mxu0 0.0
    %1392 = vmatpush1.msra.mxu0 0.0
    %1393 = vmatprep.subr.mxu0 0.0
    %1394 = vmatpush1.msra.mxu0 0.0
    %1395 = vmatprep.subr.mxu0 0.0
    %1396 = vmatpush1.msra.mxu0 0.0
    %1397 = vmatprep.subr.mxu0 0.0
    %1398 = vmatpush1.msra.mxu0 0.0
    %1399 = vmatprep.subr.mxu0 %v1373
    %1400 = vmatpush1.msra.mxu0 %v1370
    %1401 = vmatprep.subr.mxu0 %v1350
    %1402 = vmatpush1.msra.mxu0 %v1354
    %1403 = vmatprep.subr.mxu0 %v1349
    %1404 = vmatpush1.msra.mxu0 %v1353
    %1405 = vmatprep.subr.mxu0 %v1348
    %1406 = vmatpush1.msra.mxu0 %v1352
    %1407 = vmatprep.subr.mxu0 0.0
    %1408 = vmatpush2.msra.mxu0 0.0
    %1409 = vmatprep.subr.mxu0 0.0
    %1410 = vmatpush2.msra.mxu0 0.0
    %1411 = vmatprep.subr.mxu0 0.0
    %1412 = vmatpush2.msra.mxu0 0.0
    %1413 = vmatprep.subr.mxu0 0.0
    %1414 = vmatpush2.msra.mxu0 0.0
    %1415 = vmatprep.subr.mxu0 0.0
    %1416 = vmatpush2.msra.mxu0 0.0
    %1417 = vmatprep.subr.mxu0 0.0
    %1418 = vmatpush2.msra.mxu0 0.0
    %1419 = vmatprep.subr.mxu0 0.0
    %1420 = vmatpush2.msra.mxu0 0.0
    %1421 = vmatprep.subr.mxu0 0.0
    %1422 = vmatpush2.msra.mxu0 0.0
    %1423 = vmatprep.subr.mxu0 0.0
    %1424 = vmatpush2.msra.mxu0 0.0
    %1425 = vmatprep.subr.mxu0 0.0
    %1426 = vmatpush2.msra.mxu0 0.0
    %1427 = vmatprep.subr.mxu0 0.0
    %1428 = vmatpush2.msra.mxu0 0.0
    %1429 = vmatprep.subr.mxu0 0.0
    %1430 = vmatpush2.msra.mxu0 0.0
    %1431 = vmatprep.subr.mxu0 0.0
    %1432 = vmatpush2.msra.mxu0 0.0
    %1433 = vmatprep.subr.mxu0 0.0
    %1434 = vmatpush2.msra.mxu0 0.0
    %1435 = vmatprep.subr.mxu0 0.0
    %1436 = vmatpush2.msra.mxu0 0.0
    %1437 = vmatprep.subr.mxu0 0.0
    %1438 = vmatpush2.msra.mxu0 0.0
    %1439 = vmatprep.mubr.f32.mxu0 0.0
    %1440 = vmatmul.mubr.f32.gmra.mxu0 %v1361
    %v1441 = vpop.f32.mrf.mxu0
    %v1442 = vadd.f32 0.0, %v1441
    %v1443 = vpop.f32.mrf.mxu0
    %v1444 = vadd.f32 0.0, %v1443
    %1445 = vmatprep.mubr.f32.mxu0 0.0
    %1446 = vmatmul.mubr.f32.gmra.mxu0 %v1364
    %v1447 = vpop.f32.mrf.mxu0
    %v1448 = vadd.f32 0.0, %v1447
    %v1449 = vpop.f32.mrf.mxu0
    %v1450 = vadd.f32 0.0, %v1449
    %1451 = vmatprep.mubr.f32.mxu0 0.0
    %1452 = vmatmul.mubr.f32.gmra.mxu0 %v1367
    %v1453 = vpop.f32.mrf.mxu0
    %v1454 = vadd.f32 0.0, %v1453
    %v1455 = vpop.f32.mrf.mxu0
    %v1456 = vadd.f32 0.0, %v1455
    %1457 = vdwg.mxu0
    %v1458 = vadd.f32 %v1316, %v1442
    %v1459 = vadd.f32 %v1318, %v1444
    %v1460 = vadd.f32 %v1322, %v1448
    %v1461 = vadd.f32 %v1324, %v1450
    %v1462 = vadd.f32 %v1328, %v1454
    %v1463 = vadd.f32 %v1330, %v1456
    %s1464 = scalar_lea.vmem [#allocation3], 240
    %v1465 = vld [vmem:[%s1464] sm:$0xff]
    %v1466 = vld [vmem:[%s1464 + $0x8] sm:$0xff]
    %v1467 = vld [vmem:[%s1464 + $0x10] sm:$0xff]
    %v1469 = vsel %vm211, %v1465, 0
    %v1472 = vsel %vm211, %v1466, 0
    %v1475 = vsel %vm211, %v1467, 0
    %v1478 = vsel %vm221, %v1078, 0
    %v1481 = vsel %vm221, %v1079, 0
    %1483 = vmatprep.subr.mxu0 0.0
    %1484 = vmatpush1.msra.mxu0 0.0
    %1485 = vmatprep.subr.mxu0 0.0
    %1486 = vmatpush1.msra.mxu0 0.0
    %1487 = vmatprep.subr.mxu0 0.0
    %1488 = vmatpush1.msra.mxu0 0.0
    %1489 = vmatprep.subr.mxu0 0.0
    %1490 = vmatpush1.msra.mxu0 0.0
    %1491 = vmatprep.subr.mxu0 0.0
    %1492 = vmatpush1.msra.mxu0 0.0
    %1493 = vmatprep.subr.mxu0 0.0
    %1494 = vmatpush1.msra.mxu0 0.0
    %1495 = vmatprep.subr.mxu0 0.0
    %1496 = vmatpush1.msra.mxu0 0.0
    %1497 = vmatprep.subr.mxu0 0.0
    %1498 = vmatpush1.msra.mxu0 0.0
    %1499 = vmatprep.subr.mxu0 0.0
    %1500 = vmatpush1.msra.mxu0 0.0
    %1501 = vmatprep.subr.mxu0 0.0
    %1502 = vmatpush1.msra.mxu0 0.0
    %1503 = vmatprep.subr.mxu0 0.0
    %1504 = vmatpush1.msra.mxu0 0.0
    %1505 = vmatprep.subr.mxu0 0.0
    %1506 = vmatpush1.msra.mxu0 0.0
    %1507 = vmatprep.subr.mxu0 %v1481
    %1508 = vmatpush1.msra.mxu0 %v1478
    %1509 = vmatprep.subr.mxu0 %v1077
    %1510 = vmatpush1.msra.mxu0 %v1076
    %1511 = vmatprep.subr.mxu0 %v1075
    %1512 = vmatpush1.msra.mxu0 %v1074
    %1513 = vmatprep.subr.mxu0 %v1073
    %1514 = vmatpush1.msra.mxu0 %v1072
    %1515 = vmatprep.subr.mxu0 0.0
    %1516 = vmatpush2.msra.mxu0 0.0
    %1517 = vmatprep.subr.mxu0 0.0
    %1518 = vmatpush2.msra.mxu0 0.0
    %1519 = vmatprep.subr.mxu0 0.0
    %1520 = vmatpush2.msra.mxu0 0.0
    %1521 = vmatprep.subr.mxu0 0.0
    %1522 = vmatpush2.msra.mxu0 0.0
    %1523 = vmatprep.subr.mxu0 0.0
    %1524 = vmatpush2.msra.mxu0 0.0
    %1525 = vmatprep.subr.mxu0 0.0
    %1526 = vmatpush2.msra.mxu0 0.0
    %1527 = vmatprep.subr.mxu0 0.0
    %1528 = vmatpush2.msra.mxu0 0.0
    %1529 = vmatprep.subr.mxu0 0.0
    %1530 = vmatpush2.msra.mxu0 0.0
    %1531 = vmatprep.subr.mxu0 0.0
    %1532 = vmatpush2.msra.mxu0 0.0
    %1533 = vmatprep.subr.mxu0 0.0
    %1534 = vmatpush2.msra.mxu0 0.0
    %1535 = vmatprep.subr.mxu0 0.0
    %1536 = vmatpush2.msra.mxu0 0.0
    %1537 = vmatprep.subr.mxu0 0.0
    %1538 = vmatpush2.msra.mxu0 0.0
    %1539 = vmatprep.subr.mxu0 0.0
    %1540 = vmatpush2.msra.mxu0 0.0
    %1541 = vmatprep.subr.mxu0 0.0
    %1542 = vmatpush2.msra.mxu0 0.0
    %1543 = vmatprep.subr.mxu0 0.0
    %1544 = vmatpush2.msra.mxu0 0.0
    %1545 = vmatprep.subr.mxu0 0.0
    %1546 = vmatpush2.msra.mxu0 0.0
    %1547 = vmatprep.mubr.f32.mxu0 0.0
    %1548 = vmatmul.mubr.f32.gmra.mxu0 %v1469
    %v1549 = vpop.f32.mrf.mxu0
    %v1550 = vadd.f32 0.0, %v1549
    %v1551 = vpop.f32.mrf.mxu0
    %v1552 = vadd.f32 0.0, %v1551
    %1553 = vmatprep.mubr.f32.mxu0 0.0
    %1554 = vmatmul.mubr.f32.gmra.mxu0 %v1472
    %v1555 = vpop.f32.mrf.mxu0
    %v1556 = vadd.f32 0.0, %v1555
    %v1557 = vpop.f32.mrf.mxu0
    %v1558 = vadd.f32 0.0, %v1557
    %1559 = vmatprep.mubr.f32.mxu0 0.0
    %1560 = vmatmul.mubr.f32.gmra.mxu0 %v1475
    %v1561 = vpop.f32.mrf.mxu0
    %v1562 = vadd.f32 0.0, %v1561
    %v1563 = vpop.f32.mrf.mxu0
    %v1564 = vadd.f32 0.0, %v1563
    %1565 = vdwg.mxu0
    %v1566 = vadd.f32 %v1458, %v1550
    %v1567 = vadd.f32 %v1459, %v1552
    %v1568 = vadd.f32 %v1460, %v1556
    %v1569 = vadd.f32 %v1461, %v1558
    %v1570 = vadd.f32 %v1462, %v1562
    %v1571 = vadd.f32 %v1463, %v1564
    %1572 = vrot.lane.b32.xlu0 %v1072, 127
    %v1573 = vpop.permute.xlu0 %1572
    %1574 = vrot.lane.b32.xlu0 %v1074, 127
    %v1575 = vpop.permute.xlu0 %1574
    %1576 = vrot.lane.b32.xlu0 %v1076, 127
    %v1577 = vpop.permute.xlu0 %1576
    %1578 = vrot.lane.b32.xlu0 %v1078, 127
    %v1579 = vpop.permute.xlu0 %1578
    %1580 = vrot.lane.b32.xlu0 %v1073, 127
    %v1581 = vpop.permute.xlu0 %1580
    %1582 = vrot.lane.b32.xlu0 %v1075, 127
    %v1583 = vpop.permute.xlu0 %1582
    %1584 = vrot.lane.b32.xlu0 %v1077, 127
    %v1585 = vpop.permute.xlu0 %1584
    %1586 = vrot.lane.b32.xlu0 %v1079, 127
    %v1587 = vpop.permute.xlu0 %1586
    %v1588 = vsel %vm666, %v1573, %v1581
    %v1589 = vsel %vm666, %v1575, %v1583
    %v1590 = vsel %vm666, %v1577, %v1585
    %v1591 = vsel %vm666, %v1579, %v1587
    %v1592 = vsel %vm666, %v1581, %v1573
    %v1593 = vsel %vm666, %v1583, %v1575
    %v1594 = vsel %vm666, %v1585, %v1577
    %v1595 = vsel %vm666, %v1587, %v1579
    %s1596 = scalar_lea.vmem [#allocation3], 264
    %v1597 = vld [vmem:[%s1596] sm:$0xff]
    %v1598 = vld [vmem:[%s1596 + $0x8] sm:$0xff]
    %v1599 = vld [vmem:[%s1596 + $0x10] sm:$0xff]
    %v1601 = vsel %vm211, %v1597, 0
    %v1604 = vsel %vm211, %v1598, 0
    %v1607 = vsel %vm211, %v1599, 0
    %v1610 = vsel %vm221, %v1591, 0
    %v1613 = vsel %vm221, %v1595, 0
    %1615 = vmatprep.subr.mxu0 0.0
    %1616 = vmatpush1.msra.mxu0 0.0
    %1617 = vmatprep.subr.mxu0 0.0
    %1618 = vmatpush1.msra.mxu0 0.0
    %1619 = vmatprep.subr.mxu0 0.0
    %1620 = vmatpush1.msra.mxu0 0.0
    %1621 = vmatprep.subr.mxu0 0.0
    %1622 = vmatpush1.msra.mxu0 0.0
    %1623 = vmatprep.subr.mxu0 0.0
    %1624 = vmatpush1.msra.mxu0 0.0
    %1625 = vmatprep.subr.mxu0 0.0
    %1626 = vmatpush1.msra.mxu0 0.0
    %1627 = vmatprep.subr.mxu0 0.0
    %1628 = vmatpush1.msra.mxu0 0.0
    %1629 = vmatprep.subr.mxu0 0.0
    %1630 = vmatpush1.msra.mxu0 0.0
    %1631 = vmatprep.subr.mxu0 0.0
    %1632 = vmatpush1.msra.mxu0 0.0
    %1633 = vmatprep.subr.mxu0 0.0
    %1634 = vmatpush1.msra.mxu0 0.0
    %1635 = vmatprep.subr.mxu0 0.0
    %1636 = vmatpush1.msra.mxu0 0.0
    %1637 = vmatprep.subr.mxu0 0.0
    %1638 = vmatpush1.msra.mxu0 0.0
    %1639 = vmatprep.subr.mxu0 %v1613
    %1640 = vmatpush1.msra.mxu0 %v1610
    %1641 = vmatprep.subr.mxu0 %v1594
    %1642 = vmatpush1.msra.mxu0 %v1590
    %1643 = vmatprep.subr.mxu0 %v1593
    %1644 = vmatpush1.msra.mxu0 %v1589
    %1645 = vmatprep.subr.mxu0 %v1592
    %1646 = vmatpush1.msra.mxu0 %v1588
    %1647 = vmatprep.subr.mxu0 0.0
    %1648 = vmatpush2.msra.mxu0 0.0
    %1649 = vmatprep.subr.mxu0 0.0
    %1650 = vmatpush2.msra.mxu0 0.0
    %1651 = vmatprep.subr.mxu0 0.0
    %1652 = vmatpush2.msra.mxu0 0.0
    %1653 = vmatprep.subr.mxu0 0.0
    %1654 = vmatpush2.msra.mxu0 0.0
    %1655 = vmatprep.subr.mxu0 0.0
    %1656 = vmatpush2.msra.mxu0 0.0
    %1657 = vmatprep.subr.mxu0 0.0
    %1658 = vmatpush2.msra.mxu0 0.0
    %1659 = vmatprep.subr.mxu0 0.0
    %1660 = vmatpush2.msra.mxu0 0.0
    %1661 = vmatprep.subr.mxu0 0.0
    %1662 = vmatpush2.msra.mxu0 0.0
    %1663 = vmatprep.subr.mxu0 0.0
    %1664 = vmatpush2.msra.mxu0 0.0
    %1665 = vmatprep.subr.mxu0 0.0
    %1666 = vmatpush2.msra.mxu0 0.0
    %1667 = vmatprep.subr.mxu0 0.0
    %1668 = vmatpush2.msra.mxu0 0.0
    %1669 = vmatprep.subr.mxu0 0.0
    %1670 = vmatpush2.msra.mxu0 0.0
    %1671 = vmatprep.subr.mxu0 0.0
    %1672 = vmatpush2.msra.mxu0 0.0
    %1673 = vmatprep.subr.mxu0 0.0
    %1674 = vmatpush2.msra.mxu0 0.0
    %1675 = vmatprep.subr.mxu0 0.0
    %1676 = vmatpush2.msra.mxu0 0.0
    %1677 = vmatprep.subr.mxu0 0.0
    %1678 = vmatpush2.msra.mxu0 0.0
    %1679 = vmatprep.mubr.f32.mxu0 0.0
    %1680 = vmatmul.mubr.f32.gmra.mxu0 %v1601
    %v1681 = vpop.f32.mrf.mxu0
    %v1682 = vadd.f32 0.0, %v1681
    %v1683 = vpop.f32.mrf.mxu0
    %v1684 = vadd.f32 0.0, %v1683
    %1685 = vmatprep.mubr.f32.mxu0 0.0
    %1686 = vmatmul.mubr.f32.gmra.mxu0 %v1604
    %v1687 = vpop.f32.mrf.mxu0
    %v1688 = vadd.f32 0.0, %v1687
    %v1689 = vpop.f32.mrf.mxu0
    %v1690 = vadd.f32 0.0, %v1689
    %1691 = vmatprep.mubr.f32.mxu0 0.0
    %1692 = vmatmul.mubr.f32.gmra.mxu0 %v1607
    %v1693 = vpop.f32.mrf.mxu0
    %v1694 = vadd.f32 0.0, %v1693
    %v1695 = vpop.f32.mrf.mxu0
    %v1696 = vadd.f32 0.0, %v1695
    %1697 = vdwg.mxu0
    %v1698 = vadd.f32 %v1566, %v1682
    %v1699 = vadd.f32 %v1567, %v1684
    %v1700 = vadd.f32 %v1568, %v1688
    %v1701 = vadd.f32 %v1569, %v1690
    %v1702 = vadd.f32 %v1570, %v1694
    %v1703 = vadd.f32 %v1571, %v1696
    %1704 = vrot.lane.b32.xlu0 %v1072, 126
    %v1705 = vpop.permute.xlu0 %1704
    %1706 = vrot.lane.b32.xlu0 %v1074, 126
    %v1707 = vpop.permute.xlu0 %1706
    %1708 = vrot.lane.b32.xlu0 %v1076, 126
    %v1709 = vpop.permute.xlu0 %1708
    %1710 = vrot.lane.b32.xlu0 %v1078, 126
    %v1711 = vpop.permute.xlu0 %1710
    %1712 = vrot.lane.b32.xlu0 %v1073, 126
    %v1713 = vpop.permute.xlu0 %1712
    %1714 = vrot.lane.b32.xlu0 %v1075, 126
    %v1715 = vpop.permute.xlu0 %1714
    %1716 = vrot.lane.b32.xlu0 %v1077, 126
    %v1717 = vpop.permute.xlu0 %1716
    %1718 = vrot.lane.b32.xlu0 %v1079, 126
    %v1719 = vpop.permute.xlu0 %1718
    %v1720 = vsel %vm799, %v1705, %v1713
    %v1721 = vsel %vm799, %v1707, %v1715
    %v1722 = vsel %vm799, %v1709, %v1717
    %v1723 = vsel %vm799, %v1711, %v1719
    %v1724 = vsel %vm799, %v1713, %v1705
    %v1725 = vsel %vm799, %v1715, %v1707
    %v1726 = vsel %vm799, %v1717, %v1709
    %v1727 = vsel %vm799, %v1719, %v1711
    %s1728 = scalar_lea.vmem [#allocation3], 288
    %v1729 = vld [vmem:[%s1728] sm:$0xff]
    %v1730 = vld [vmem:[%s1728 + $0x8] sm:$0xff]
    %v1731 = vld [vmem:[%s1728 + $0x10] sm:$0xff]
    %v1733 = vsel %vm211, %v1729, 0
    %v1736 = vsel %vm211, %v1730, 0
    %v1739 = vsel %vm211, %v1731, 0
    %v1742 = vsel %vm221, %v1723, 0
    %v1745 = vsel %vm221, %v1727, 0
    %1747 = vmatprep.subr.mxu0 0.0
    %1748 = vmatpush1.msra.mxu0 0.0
    %1749 = vmatprep.subr.mxu0 0.0
    %1750 = vmatpush1.msra.mxu0 0.0
    %1751 = vmatprep.subr.mxu0 0.0
    %1752 = vmatpush1.msra.mxu0 0.0
    %1753 = vmatprep.subr.mxu0 0.0
    %1754 = vmatpush1.msra.mxu0 0.0
    %1755 = vmatprep.subr.mxu0 0.0
    %1756 = vmatpush1.msra.mxu0 0.0
    %1757 = vmatprep.subr.mxu0 0.0
    %1758 = vmatpush1.msra.mxu0 0.0
    %1759 = vmatprep.subr.mxu0 0.0
    %1760 = vmatpush1.msra.mxu0 0.0
    %1761 = vmatprep.subr.mxu0 0.0
    %1762 = vmatpush1.msra.mxu0 0.0
    %1763 = vmatprep.subr.mxu0 0.0
    %1764 = vmatpush1.msra.mxu0 0.0
    %1765 = vmatprep.subr.mxu0 0.0
    %1766 = vmatpush1.msra.mxu0 0.0
    %1767 = vmatprep.subr.mxu0 0.0
    %1768 = vmatpush1.msra.mxu0 0.0
    %1769 = vmatprep.subr.mxu0 0.0
    %1770 = vmatpush1.msra.mxu0 0.0
    %1771 = vmatprep.subr.mxu0 %v1745
    %1772 = vmatpush1.msra.mxu0 %v1742
    %1773 = vmatprep.subr.mxu0 %v1726
    %1774 = vmatpush1.msra.mxu0 %v1722
    %1775 = vmatprep.subr.mxu0 %v1725
    %1776 = vmatpush1.msra.mxu0 %v1721
    %1777 = vmatprep.subr.mxu0 %v1724
    %1778 = vmatpush1.msra.mxu0 %v1720
    %1779 = vmatprep.subr.mxu0 0.0
    %1780 = vmatpush2.msra.mxu0 0.0
    %1781 = vmatprep.subr.mxu0 0.0
    %1782 = vmatpush2.msra.mxu0 0.0
    %1783 = vmatprep.subr.mxu0 0.0
    %1784 = vmatpush2.msra.mxu0 0.0
    %1785 = vmatprep.subr.mxu0 0.0
    %1786 = vmatpush2.msra.mxu0 0.0
    %1787 = vmatprep.subr.mxu0 0.0
    %1788 = vmatpush2.msra.mxu0 0.0
    %1789 = vmatprep.subr.mxu0 0.0
    %1790 = vmatpush2.msra.mxu0 0.0
    %1791 = vmatprep.subr.mxu0 0.0
    %1792 = vmatpush2.msra.mxu0 0.0
    %1793 = vmatprep.subr.mxu0 0.0
    %1794 = vmatpush2.msra.mxu0 0.0
    %1795 = vmatprep.subr.mxu0 0.0
    %1796 = vmatpush2.msra.mxu0 0.0
    %1797 = vmatprep.subr.mxu0 0.0
    %1798 = vmatpush2.msra.mxu0 0.0
    %1799 = vmatprep.subr.mxu0 0.0
    %1800 = vmatpush2.msra.mxu0 0.0
    %1801 = vmatprep.subr.mxu0 0.0
    %1802 = vmatpush2.msra.mxu0 0.0
    %1803 = vmatprep.subr.mxu0 0.0
    %1804 = vmatpush2.msra.mxu0 0.0
    %1805 = vmatprep.subr.mxu0 0.0
    %1806 = vmatpush2.msra.mxu0 0.0
    %1807 = vmatprep.subr.mxu0 0.0
    %1808 = vmatpush2.msra.mxu0 0.0
    %1809 = vmatprep.subr.mxu0 0.0
    %1810 = vmatpush2.msra.mxu0 0.0
    %1811 = vmatprep.mubr.f32.mxu0 0.0
    %1812 = vmatmul.mubr.f32.gmra.mxu0 %v1733
    %v1813 = vpop.f32.mrf.mxu0
    %v1814 = vadd.f32 0.0, %v1813
    %v1815 = vpop.f32.mrf.mxu0
    %v1816 = vadd.f32 0.0, %v1815
    %1817 = vmatprep.mubr.f32.mxu0 0.0
    %1818 = vmatmul.mubr.f32.gmra.mxu0 %v1736
    %v1819 = vpop.f32.mrf.mxu0
    %v1820 = vadd.f32 0.0, %v1819
    %v1821 = vpop.f32.mrf.mxu0
    %v1822 = vadd.f32 0.0, %v1821
    %1823 = vmatprep.mubr.f32.mxu0 0.0
    %1824 = vmatmul.mubr.f32.gmra.mxu0 %v1739
    %v1825 = vpop.f32.mrf.mxu0
    %v1826 = vadd.f32 0.0, %v1825
    %v1827 = vpop.f32.mrf.mxu0
    %v1828 = vadd.f32 0.0, %v1827
    %1829 = vdwg.mxu0
    %v1830 = vadd.f32 %v1698, %v1814
    %v1831 = vadd.f32 %v1699, %v1816
    %v1832 = vadd.f32 %v1700, %v1820
    %v1833 = vadd.f32 %v1701, %v1822
    %v1834 = vadd.f32 %v1702, %v1826
    %v1835 = vadd.f32 %v1703, %v1828
    %1836 = vrot.lane.b32.xlu0 %v1072, 125
    %v1837 = vpop.permute.xlu0 %1836
    %1838 = vrot.lane.b32.xlu0 %v1074, 125
    %v1839 = vpop.permute.xlu0 %1838
    %1840 = vrot.lane.b32.xlu0 %v1076, 125
    %v1841 = vpop.permute.xlu0 %1840
    %1842 = vrot.lane.b32.xlu0 %v1078, 125
    %v1843 = vpop.permute.xlu0 %1842
    %1844 = vrot.lane.b32.xlu0 %v1073, 125
    %v1845 = vpop.permute.xlu0 %1844
    %1846 = vrot.lane.b32.xlu0 %v1075, 125
    %v1847 = vpop.permute.xlu0 %1846
    %1848 = vrot.lane.b32.xlu0 %v1077, 125
    %v1849 = vpop.permute.xlu0 %1848
    %1850 = vrot.lane.b32.xlu0 %v1079, 125
    %v1851 = vpop.permute.xlu0 %1850
    %v1852 = vsel %vm932, %v1837, %v1845
    %v1853 = vsel %vm932, %v1839, %v1847
    %v1854 = vsel %vm932, %v1841, %v1849
    %v1855 = vsel %vm932, %v1843, %v1851
    %v1856 = vsel %vm932, %v1845, %v1837
    %v1857 = vsel %vm932, %v1847, %v1839
    %v1858 = vsel %vm932, %v1849, %v1841
    %v1859 = vsel %vm932, %v1851, %v1843
    %s1860 = scalar_lea.vmem [#allocation3], 312
    %v1861 = vld [vmem:[%s1860] sm:$0xff]
    %v1862 = vld [vmem:[%s1860 + $0x8] sm:$0xff]
    %v1863 = vld [vmem:[%s1860 + $0x10] sm:$0xff]
    %v1865 = vsel %vm211, %v1861, 0
    %v1868 = vsel %vm211, %v1862, 0
    %v1871 = vsel %vm211, %v1863, 0
    %v1874 = vsel %vm221, %v1855, 0
    %v1877 = vsel %vm221, %v1859, 0
    %1879 = vmatprep.subr.mxu0 0.0
    %1880 = vmatpush1.msra.mxu0 0.0
    %1881 = vmatprep.subr.mxu0 0.0
    %1882 = vmatpush1.msra.mxu0 0.0
    %1883 = vmatprep.subr.mxu0 0.0
    %1884 = vmatpush1.msra.mxu0 0.0
    %1885 = vmatprep.subr.mxu0 0.0
    %1886 = vmatpush1.msra.mxu0 0.0
    %1887 = vmatprep.subr.mxu0 0.0
    %1888 = vmatpush1.msra.mxu0 0.0
    %1889 = vmatprep.subr.mxu0 0.0
    %1890 = vmatpush1.msra.mxu0 0.0
    %1891 = vmatprep.subr.mxu0 0.0
    %1892 = vmatpush1.msra.mxu0 0.0
    %1893 = vmatprep.subr.mxu0 0.0
    %1894 = vmatpush1.msra.mxu0 0.0
    %1895 = vmatprep.subr.mxu0 0.0
    %1896 = vmatpush1.msra.mxu0 0.0
    %1897 = vmatprep.subr.mxu0 0.0
    %1898 = vmatpush1.msra.mxu0 0.0
    %1899 = vmatprep.subr.mxu0 0.0
    %1900 = vmatpush1.msra.mxu0 0.0
    %1901 = vmatprep.subr.mxu0 0.0
    %1902 = vmatpush1.msra.mxu0 0.0
    %1903 = vmatprep.subr.mxu0 %v1877
    %1904 = vmatpush1.msra.mxu0 %v1874
    %1905 = vmatprep.subr.mxu0 %v1858
    %1906 = vmatpush1.msra.mxu0 %v1854
    %1907 = vmatprep.subr.mxu0 %v1857
    %1908 = vmatpush1.msra.mxu0 %v1853
    %1909 = vmatprep.subr.mxu0 %v1856
    %1910 = vmatpush1.msra.mxu0 %v1852
    %1911 = vmatprep.subr.mxu0 0.0
    %1912 = vmatpush2.msra.mxu0 0.0
    %1913 = vmatprep.subr.mxu0 0.0
    %1914 = vmatpush2.msra.mxu0 0.0
    %1915 = vmatprep.subr.mxu0 0.0
    %1916 = vmatpush2.msra.mxu0 0.0
    %1917 = vmatprep.subr.mxu0 0.0
    %1918 = vmatpush2.msra.mxu0 0.0
    %1919 = vmatprep.subr.mxu0 0.0
    %1920 = vmatpush2.msra.mxu0 0.0
    %1921 = vmatprep.subr.mxu0 0.0
    %1922 = vmatpush2.msra.mxu0 0.0
    %1923 = vmatprep.subr.mxu0 0.0
    %1924 = vmatpush2.msra.mxu0 0.0
    %1925 = vmatprep.subr.mxu0 0.0
    %1926 = vmatpush2.msra.mxu0 0.0
    %1927 = vmatprep.subr.mxu0 0.0
    %1928 = vmatpush2.msra.mxu0 0.0
    %1929 = vmatprep.subr.mxu0 0.0
    %1930 = vmatpush2.msra.mxu0 0.0
    %1931 = vmatprep.subr.mxu0 0.0
    %1932 = vmatpush2.msra.mxu0 0.0
    %1933 = vmatprep.subr.mxu0 0.0
    %1934 = vmatpush2.msra.mxu0 0.0
    %1935 = vmatprep.subr.mxu0 0.0
    %1936 = vmatpush2.msra.mxu0 0.0
    %1937 = vmatprep.subr.mxu0 0.0
    %1938 = vmatpush2.msra.mxu0 0.0
    %1939 = vmatprep.subr.mxu0 0.0
    %1940 = vmatpush2.msra.mxu0 0.0
    %1941 = vmatprep.subr.mxu0 0.0
    %1942 = vmatpush2.msra.mxu0 0.0
    %1943 = vmatprep.mubr.f32.mxu0 0.0
    %1944 = vmatmul.mubr.f32.gmra.mxu0 %v1865
    %v1945 = vpop.f32.mrf.mxu0
    %v1946 = vadd.f32 0.0, %v1945
    %v1947 = vpop.f32.mrf.mxu0
    %v1948 = vadd.f32 0.0, %v1947
    %1949 = vmatprep.mubr.f32.mxu0 0.0
    %1950 = vmatmul.mubr.f32.gmra.mxu0 %v1868
    %v1951 = vpop.f32.mrf.mxu0
    %v1952 = vadd.f32 0.0, %v1951
    %v1953 = vpop.f32.mrf.mxu0
    %v1954 = vadd.f32 0.0, %v1953
    %1955 = vmatprep.mubr.f32.mxu0 0.0
    %1956 = vmatmul.mubr.f32.gmra.mxu0 %v1871
    %v1957 = vpop.f32.mrf.mxu0
    %v1958 = vadd.f32 0.0, %v1957
    %v1959 = vpop.f32.mrf.mxu0
    %v1960 = vadd.f32 0.0, %v1959
    %1961 = vdwg.mxu0
    %v1962 = vadd.f32 %v1830, %v1946
    %v1963 = vadd.f32 %v1831, %v1948
    %v1964 = vadd.f32 %v1832, %v1952
    %v1965 = vadd.f32 %v1833, %v1954
    %v1966 = vadd.f32 %v1834, %v1958
    %v1967 = vadd.f32 %v1835, %v1960
    %v1968 = vadd.f32 %v1962, %v122
    %v1969 = vadd.f32 %v1963, %v124
    %vm1970 = vcmp.ge.f32.partialorder %v1968, 0.0
    %vm1971 = vcmp.ge.f32.partialorder %v1969, 0.0
    %v1972 = vmul.f32 %v1968, 0.01
    %v1973 = vmul.f32 %v1969, 0.01
    %v1974 = vsel %vm1970, %v1968, %v1972
    %v1975 = vsel %vm1971, %v1969, %v1973
    %1976 = vst [vmem:[#allocation6] sm:$0xff] %v1974
    %1977 = vst [vmem:[#allocation6 + $0x8] sm:$0xff] %v1975
    %v1978 = vadd.f32 %v1964, %v122
    %v1979 = vadd.f32 %v1965, %v124
    %vm1980 = vcmp.ge.f32.partialorder %v1978, 0.0
    %vm1981 = vcmp.ge.f32.partialorder %v1979, 0.0
    %v1982 = vmul.f32 %v1978, 0.01
    %v1983 = vmul.f32 %v1979, 0.01
    %v1984 = vsel %vm1980, %v1978, %v1982
    %v1985 = vsel %vm1981, %v1979, %v1983
    %1986 = vst [vmem:[#allocation6 + $0x10] sm:$0xff] %v1984
    %1987 = vst [vmem:[#allocation6 + $0x18] sm:$0xff] %v1985
    %v1988 = vadd.f32 %v1966, %v122
    %v1989 = vadd.f32 %v1967, %v124
    %vm1990 = vcmp.ge.f32.partialorder %v1988, 0.0
    %vm1991 = vcmp.ge.f32.partialorder %v1989, 0.0
    %v1992 = vmul.f32 %v1988, 0.01
    %v1993 = vmul.f32 %v1989, 0.01
    %v1994 = vsel %vm1990, %v1988, %v1992
    %v1995 = vsel %vm1991, %v1989, %v1993
    %1996 = vst [vmem:[#allocation6 + $0x20] sm:$0xff] %v1994
    %1997 = vst [vmem:[#allocation6 + $0x28] sm:$0xff] %v1995
    // Predicated region
    $region26: #{tpu_custom_call.1} parent=1 // pred_check
      _
    $region27: #{tpu_custom_call.1} parent=1 // pred_check_branch
      %1999 = sbr.rel (0) target = $region29
    $region28: #{tpu_custom_call.1} parent=1 // pred_region
      %s2001 = ssub.s32 768, 768
      %2002 = vsyncadd [#allocation5], %s2001
      %s2003 = sshll.u32 [#allocation6], 4
      %s2004 = int_to_ptr.vmem [resolvable:$true] %s2003
      %2009 = dma.vmem_to_hbm [thread:$0]  %s2004, 768, %s5, [#allocation5], 256, 256, 16
    $region29: #{tpu_custom_call.1} parent=1 // pred_fallthru
      _
    // Predicated region
    $region30: #{tpu_custom_call.1} parent=1 // pred_check
      _
    $region31: #{tpu_custom_call.1} parent=1 // pred_check_branch
      %2011 = sbr.rel (0) target = $region33
    $region32: #{tpu_custom_call.1} parent=1 // pred_region
      %2012 = dma.done [#allocation5], 768
    $region33: #{tpu_custom_call.1} parent=1 // pred_fallthru
      _
    %2013 = vsyncpa [#allocation4], 1
    %2014 = vsyncpa [#allocation5], 1

</llo_original>
